<compile_context>
chip_gen: v7x
topology: tpu7x:2x2x1
jax: 0.10.0
libtpu: 0.0.40
codegen_flags: <defaults>
</compile_context>

<pallas_src>
import functools

import jax
import jax.numpy as jnp
from jax.experimental import pallas as pl
from jax.experimental.pallas import tpu as pltpu


LATENT = 128
HIDDEN = (256, 512, 784)   # module defaults: hidden=[256, 512, 784]

_ROW_ALIGN = 16            # bf16 sublane packing: keep row tiles (16,128)-native


def _round_up(x, m):
    return (x + m - 1) // m * m


def _cdiv(a, b):
    return -(-a // b)


def _decoder_mlp_kernel(z_ref, w1_ref, b1_ref, w2_ref, b2_ref, w3_ref, b3_ref,
                        o_ref, h1_ref, h2_ref):
    # Three back-to-back MXU matmuls (bf16 operands, f32 accumulation), ReLU
    # on the VPU, sigmoid on the EUP. Intermediates live in bf16 VMEM scratch
    # so large batch tiles neither spill vregs nor pay f32 store bandwidth.
    h1 = jnp.dot(z_ref[...], w1_ref[...], preferred_element_type=jnp.float32)
    h1_ref[...] = jnp.maximum(h1 + b1_ref[...], 0.0).astype(jnp.bfloat16)   # Linear+ReLU

    h2 = jnp.dot(h1_ref[...], w2_ref[...], preferred_element_type=jnp.float32)
    h2_ref[...] = jnp.maximum(h2 + b2_ref[...], 0.0).astype(jnp.bfloat16)   # Linear+ReLU

    h3 = jnp.dot(h2_ref[...], w3_ref[...], preferred_element_type=jnp.float32)
    h3 = jnp.maximum(h3 + b3_ref[...], 0.0)                                 # Linear+ReLU

    o_ref[...] = jax.nn.sigmoid(h3).astype(o_ref.dtype)                     # out_activation


@functools.partial(jax.jit, static_argnames=("tm",))
def decoder_mlp(z, params, *, tm=1024):
    """params = ((w1, b1), (w2, b2), (w3, b3)); w_i: (in, out); b_i: (1, out).

    Returns bf16 activations of shape (bs, hidden[-1])."""
    bs = z.shape[0]
    z2d = z.reshape(bs, -1).astype(jnp.bfloat16)                 # z.reshape(bs, -1)
    latent = z2d.shape[1]
    (w1, b1), (w2, b2), (w3, b3) = params
    h1, h2, h3 = w1.shape[1], w2.shape[1], w3.shape[1]

    # Row-tile policy: balanced tiles (pad bounded by <_ROW_ALIGN rows per
    # tile) and at least two grid steps when the batch allows it, so the
    # "parallel" grid axis shards across both v7x TensorCores.
    n_tiles = max(_cdiv(bs, tm), 1)
    if n_tiles == 1 and bs >= 2 * _ROW_ALIGN:
        n_tiles = 2
    tm_eff = _round_up(_cdiv(bs, n_tiles), _ROW_ALIGN)
    bsp = tm_eff * n_tiles
    if bsp != bs:
        z2d = jnp.pad(z2d, ((0, bsp - bs), (0, 0)))
    grid = (n_tiles,)

    # bf16 weights (halves weight HBM traffic, native MXU rate); f32 biases.
    w1b = w1.astype(jnp.bfloat16)
    w2b = w2.astype(jnp.bfloat16)
    w3b = w3.astype(jnp.bfloat16)
    b1f = b1.astype(jnp.float32)
    b2f = b2.astype(jnp.float32)
    b3f = b3.astype(jnp.float32)

    w_bytes = (w1b.size + w2b.size + w3b.size) * 2
    b_bytes = (b1f.size + b2f.size + b3f.size) * 4

    flops = 2 * bsp * (latent * h1 + h1 * h2 + h2 * h3)
    bytes_accessed = z2d.size * 2 + bsp * h3 * 2 + w_bytes + b_bytes

    # VMEM budget: double-buffered bf16 z/out tiles, weights/biases counted
    # twice (Pallas still allocates two buffers even with constant index_maps),
    # bf16 scratch intermediates, plus headroom.
    vmem_bytes = int(
        2 * tm_eff * latent * 2          # z tiles
        + 2 * tm_eff * h3 * 2            # out tiles
        + 2 * (w_bytes + b_bytes)        # resident weights / biases
        + tm_eff * (h1 + h2) * 2         # bf16 scratch
    ) + (8 << 20)
    vmem_limit = min(vmem_bytes, 48 * 1024 * 1024)   # fits v7x's 64 MiB/TC too

    out = pl.pallas_call(
        _decoder_mlp_kernel,
        out_shape=jax.ShapeDtypeStruct((bsp, h3), jnp.bfloat16),
        grid_spec=pltpu.PrefetchScalarGridSpec(
            num_scalar_prefetch=0,
            grid=grid,
            in_specs=[
                pl.BlockSpec((tm_eff, latent), lambda i: (i, 0)),  # z: tiled
                pl.BlockSpec((latent, h1), lambda i: (0, 0)),      # weights/biases:
                pl.BlockSpec((1, h1), lambda i: (0, 0)),           # VMEM-resident
                pl.BlockSpec((h1, h2), lambda i: (0, 0)),
                pl.BlockSpec((1, h2), lambda i: (0, 0)),
                pl.BlockSpec((h2, h3), lambda i: (0, 0)),
                pl.BlockSpec((1, h3), lambda i: (0, 0)),
            ],
            # Last block dim (784) equals the full array dim -> legal; only the
            # final 16 lanes get masked tail stores.
            out_specs=pl.BlockSpec((tm_eff, h3), lambda i: (i, 0)),
            scratch_shapes=[
                pltpu.VMEM((tm_eff, h1), jnp.bfloat16),
                pltpu.VMEM((tm_eff, h2), jnp.bfloat16),
            ],
        ),
        compiler_params=pltpu.CompilerParams(
            dimension_semantics=("parallel",),
            vmem_limit_bytes=vmem_limit,
        ),
        cost_estimate=pl.CostEstimate(
            flops=flops,
            transcendentals=bsp * h3,      # sigmoid
            bytes_accessed=bytes_accessed,
        ),
    )(z2d, w1b, b1f, w2b, b2f, w3b, b3f)

    if bsp != bs:
        out = out[:bs]                    # only the (bounded) row padding
    return out


def init_params(key, layer_sizes):
    """Deterministic synthetic init (matches nn.Linear shapes, transposed)."""
    params = []
    for in_, out_ in zip(layer_sizes, layer_sizes[1:]):
        key, kw, kb = jax.random.split(key, 3)
        bound = 1.0 / (in_ ** 0.5)
        w = jax.random.uniform(kw, (in_, out_), jnp.float32, -bound, bound)
        b = jax.random.uniform(kb, (1, out_), jnp.float32, -bound, bound)
        params.append((w, b))
    return params


def decoder_mlp_ref(z, params):
    """Pure-JAX reference matching the kernel's bf16-weight / f32-acc math."""
    x = z.reshape(z.shape[0], -1).astype(jnp.float32)
    for (w, b) in params:
        y = jnp.dot(x.astype(jnp.bfloat16), w.astype(jnp.bfloat16),
                    preferred_element_type=jnp.float32) + b.astype(jnp.float32)
        x = jnp.maximum(y, 0.0)
    return jax.nn.sigmoid(x)


if __name__ == "__main__":
    key = jax.random.PRNGKey(0)
    key, kz = jax.random.split(key)

    batch = 8
    layer_sizes = [LATENT, *HIDDEN]

    z = jax.random.normal(kz, (batch, LATENT), jnp.float32)
    params = init_params(key, layer_sizes)

    out = decoder_mlp(z, params)
    out = jax.block_until_ready(out)

    ref = decoder_mlp_ref(z, params)
    assert out.shape == (batch, HIDDEN[-1]), out.shape
    assert out.dtype == jnp.bfloat16, out.dtype
    # bf16 output: half-ulp near 1.0 is ~2e-3, so compare with a 5e-3 budget.
    err = float(jnp.max(jnp.abs(out.astype(jnp.float32) - ref)))
    assert err < 5e-3, err

    print("KERNEL_OK")
</pallas_src>

<mosaic_0001>
module attributes {stable_mosaic.version = 11 : i64} {
  func.func @_decoder_mlp_kernel(%arg0: i32, %arg1: memref<16x128xbf16, #tpu.memory_space<vmem>>, %arg2: memref<128x256xbf16, #tpu.memory_space<vmem>>, %arg3: memref<1x256xf32, #tpu.memory_space<vmem>>, %arg4: memref<256x512xbf16, #tpu.memory_space<vmem>>, %arg5: memref<1x512xf32, #tpu.memory_space<vmem>>, %arg6: memref<512x784xbf16, #tpu.memory_space<vmem>>, %arg7: memref<1x784xf32, #tpu.memory_space<vmem>>, %arg8: memref<16x784xbf16, #tpu.memory_space<vmem>>, %arg9: memref<16x256xbf16, #tpu.memory_space<vmem>>, %arg10: memref<16x512xbf16, #tpu.memory_space<vmem>>) attributes {dimension_semantics = [#tpu.dimension_semantics<parallel>], iteration_bounds = array<i64: 1>, scalar_prefetch = 0 : i64, scratch_operands = 2 : i64, tpu.core_type = #tpu.core_type<tc>, window_params = [{transform_indices = @transform_0, window_bounds = array<i64: 16, 128>}, {pipeline_mode = #tpu.pipeline_mode<synchronous>, transform_indices = @transform_1, window_bounds = array<i64: 128, 256>}, {pipeline_mode = #tpu.pipeline_mode<synchronous>, transform_indices = @transform_2, window_bounds = array<i64: 1, 256>}, {pipeline_mode = #tpu.pipeline_mode<synchronous>, transform_indices = @transform_3, window_bounds = array<i64: 256, 512>}, {pipeline_mode = #tpu.pipeline_mode<synchronous>, transform_indices = @transform_4, window_bounds = array<i64: 1, 512>}, {pipeline_mode = #tpu.pipeline_mode<synchronous>, transform_indices = @transform_5, window_bounds = array<i64: 512, 784>}, {pipeline_mode = #tpu.pipeline_mode<synchronous>, transform_indices = @transform_6, window_bounds = array<i64: 1, 784>}, {transform_indices = @transform_7, window_bounds = array<i64: 16, 784>}]} {
    %c0 = arith.constant 0 : index
    %c0_0 = arith.constant 0 : index
    %0 = vector.load %arg1[%c0, %c0_0] : memref<16x128xbf16, #tpu.memory_space<vmem>>, vector<16x128xbf16>
    %c0_1 = arith.constant 0 : index
    %c0_2 = arith.constant 0 : index
    %1 = vector.load %arg2[%c0_1, %c0_2] : memref<128x256xbf16, #tpu.memory_space<vmem>>, vector<128x256xbf16>
    %cst = arith.constant dense<0.000000e+00> : vector<16x256xf32>
    %2 = tpu.matmul %0, %1, %cst {dimension_numbers = #tpu.dot_dimension_numbers<[1], [0], [0], [1], [0, 0, 1, 1], [], []>} : vector<16x128xbf16>, vector<128x256xbf16>, vector<16x256xf32> -> vector<16x256xf32>
    %c0_3 = arith.constant 0 : index
    %c0_4 = arith.constant 0 : index
    %3 = vector.load %arg3[%c0_3, %c0_4] : memref<1x256xf32, #tpu.memory_space<vmem>>, vector<1x256xf32>
    %4 = vector.broadcast %3 : vector<1x256xf32> to vector<16x256xf32>
    %5 = arith.addf %2, %4 : vector<16x256xf32>
    %cst_5 = arith.constant 0.000000e+00 : f32
    %6 = vector.broadcast %cst_5 : f32 to vector<16x256xf32>
    %7 = arith.maximumf %5, %6 : vector<16x256xf32>
    %8 = arith.truncf %7 : vector<16x256xf32> to vector<16x256xbf16>
    %c0_6 = arith.constant 0 : index
    %c0_7 = arith.constant 0 : index
    %9 = vector.load %arg9[%c0_6, %c0_7] : memref<16x256xbf16, #tpu.memory_space<vmem>>, vector<16x256xbf16>
    tpu.vector_store %arg9[%c0_6, %c0_7], %8 {strides = array<i32>} : memref<16x256xbf16, #tpu.memory_space<vmem>>, vector<16x256xbf16>,
    %c0_8 = arith.constant 0 : index
    %c0_9 = arith.constant 0 : index
    %10 = vector.load %arg9[%c0_8, %c0_9] : memref<16x256xbf16, #tpu.memory_space<vmem>>, vector<16x256xbf16>
    %c0_10 = arith.constant 0 : index
    %c0_11 = arith.constant 0 : index
    %11 = vector.load %arg4[%c0_10, %c0_11] : memref<256x512xbf16, #tpu.memory_space<vmem>>, vector<256x512xbf16>
    %cst_12 = arith.constant dense<0.000000e+00> : vector<16x512xf32>
    %12 = tpu.matmul %10, %11, %cst_12 {dimension_numbers = #tpu.dot_dimension_numbers<[1], [0], [0], [1], [0, 0, 1, 1], [], []>} : vector<16x256xbf16>, vector<256x512xbf16>, vector<16x512xf32> -> vector<16x512xf32>
    %c0_13 = arith.constant 0 : index
    %c0_14 = arith.constant 0 : index
    %13 = vector.load %arg5[%c0_13, %c0_14] : memref<1x512xf32, #tpu.memory_space<vmem>>, vector<1x512xf32>
    %14 = vector.broadcast %13 : vector<1x512xf32> to vector<16x512xf32>
    %15 = arith.addf %12, %14 : vector<16x512xf32>
    %cst_15 = arith.constant 0.000000e+00 : f32
    %16 = vector.broadcast %cst_15 : f32 to vector<16x512xf32>
    %17 = arith.maximumf %15, %16 : vector<16x512xf32>
    %18 = arith.truncf %17 : vector<16x512xf32> to vector<16x512xbf16>
    %c0_16 = arith.constant 0 : index
    %c0_17 = arith.constant 0 : index
    %19 = vector.load %arg10[%c0_16, %c0_17] : memref<16x512xbf16, #tpu.memory_space<vmem>>, vector<16x512xbf16>
    tpu.vector_store %arg10[%c0_16, %c0_17], %18 {strides = array<i32>} : memref<16x512xbf16, #tpu.memory_space<vmem>>, vector<16x512xbf16>,
    %c0_18 = arith.constant 0 : index
    %c0_19 = arith.constant 0 : index
    %20 = vector.load %arg10[%c0_18, %c0_19] : memref<16x512xbf16, #tpu.memory_space<vmem>>, vector<16x512xbf16>
    %c0_20 = arith.constant 0 : index
    %c0_21 = arith.constant 0 : index
    %21 = vector.load %arg6[%c0_20, %c0_21] : memref<512x784xbf16, #tpu.memory_space<vmem>>, vector<512x784xbf16>
    %cst_22 = arith.constant dense<0.000000e+00> : vector<16x784xf32>
    %22 = tpu.matmul %20, %21, %cst_22 {dimension_numbers = #tpu.dot_dimension_numbers<[1], [0], [0], [1], [0, 0, 1, 1], [], []>} : vector<16x512xbf16>, vector<512x784xbf16>, vector<16x784xf32> -> vector<16x784xf32>
    %c0_23 = arith.constant 0 : index
    %c0_24 = arith.constant 0 : index
    %23 = vector.load %arg7[%c0_23, %c0_24] : memref<1x784xf32, #tpu.memory_space<vmem>>, vector<1x784xf32>
    %24 = vector.broadcast %23 : vector<1x784xf32> to vector<16x784xf32>
    %25 = arith.addf %22, %24 : vector<16x784xf32>
    %cst_25 = arith.constant 0.000000e+00 : f32
    %26 = vector.broadcast %cst_25 : f32 to vector<16x784xf32>
    %27 = arith.maximumf %25, %26 : vector<16x784xf32>
    %28 = arith.negf %27 : vector<16x784xf32>
    %29 = math.exp %28 : vector<16x784xf32>
    %cst_26 = arith.constant 1.000000e+00 : f32
    %30 = vector.broadcast %cst_26 : f32 to vector<16x784xf32>
    %31 = arith.addf %30, %29 : vector<16x784xf32>
    %32 = arith.divf %30, %31 : vector<16x784xf32>
    %33 = arith.truncf %32 : vector<16x784xf32> to vector<16x784xbf16>
    %c0_27 = arith.constant 0 : index
    %c0_28 = arith.constant 0 : index
    %34 = vector.load %arg8[%c0_27, %c0_28] : memref<16x784xbf16, #tpu.memory_space<vmem>>, vector<16x784xbf16>
    tpu.vector_store %arg8[%c0_27, %c0_28], %33 {strides = array<i32>} : memref<16x784xbf16, #tpu.memory_space<vmem>>, vector<16x784xbf16>,
    return
  }
  func.func @transform_0(%arg0: i32) -> (i32, i32) {
    %c0_i32 = arith.constant 0 : i32
    %c0_i32_0 = arith.constant 0 : i32
    return %arg0, %c0_i32 : i32, i32
  }
  func.func @transform_1(%arg0: i32) -> (i32, i32) {
    %c0_i32 = arith.constant 0 : i32
    %c0_i32_0 = arith.constant 0 : i32
    %c0_i32_1 = arith.constant 0 : i32
    return %c0_i32, %c0_i32_0 : i32, i32
  }
  func.func @transform_2(%arg0: i32) -> (i32, i32) {
    %c0_i32 = arith.constant 0 : i32
    %c0_i32_0 = arith.constant 0 : i32
    %c0_i32_1 = arith.constant 0 : i32
    return %c0_i32, %c0_i32_0 : i32, i32
  }
  func.func @transform_3(%arg0: i32) -> (i32, i32) {
    %c0_i32 = arith.constant 0 : i32
    %c0_i32_0 = arith.constant 0 : i32
    %c0_i32_1 = arith.constant 0 : i32
    return %c0_i32, %c0_i32_0 : i32, i32
  }
  func.func @transform_4(%arg0: i32) -> (i32, i32) {
    %c0_i32 = arith.constant 0 : i32
    %c0_i32_0 = arith.constant 0 : i32
    %c0_i32_1 = arith.constant 0 : i32
    return %c0_i32, %c0_i32_0 : i32, i32
  }
  func.func @transform_5(%arg0: i32) -> (i32, i32) {
    %c0_i32 = arith.constant 0 : i32
    %c0_i32_0 = arith.constant 0 : i32
    %c0_i32_1 = arith.constant 0 : i32
    return %c0_i32, %c0_i32_0 : i32, i32
  }
  func.func @transform_6(%arg0: i32) -> (i32, i32) {
    %c0_i32 = arith.constant 0 : i32
    %c0_i32_0 = arith.constant 0 : i32
    %c0_i32_1 = arith.constant 0 : i32
    return %c0_i32, %c0_i32_0 : i32, i32
  }
  func.func @transform_7(%arg0: i32) -> (i32, i32) {
    %c0_i32 = arith.constant 0 : i32
    %c0_i32_0 = arith.constant 0 : i32
    return %arg0, %c0_i32 : i32, i32
  }
}

</mosaic_0001>

<llo_original>
// kernel: decoder_mlp.1
$region0: #{decoder_mlp.1}
  #allocation0 [shape = 'u32[]', space=smem, size = 0x4, offset = 0x4, fixed_abs, tag = 'smem constant byte address 0x4 - core index']
  #allocation1 [shape = 'u32[144,128]{1,0:T(1,128)}', space=vmem, size = 0x12000, scoped, tag = 'internal scratch']
  #allocation2 [shape = 'bf16[16,256]{1,0:T(16,128)(2,1)}', space=vmem, size = 0x2000, scoped, tag = 'scratch operand']
  #allocation3 [shape = 'bf16[16,512]{1,0:T(16,128)(2,1)}', space=vmem, size = 0x4000, scoped, tag = 'scratch operand']
  %s0 = inlined_call_operand.vmem [shape: bf16[16,128], index: 0, kind: input, shape index: {}]
  %s1 = inlined_call_operand.vmem [shape: bf16[128,256], index: 1, kind: input, shape index: {}]
  %s2 = inlined_call_operand.vmem [shape: f32[1,256], index: 2, kind: input, shape index: {}]
  %s3 = inlined_call_operand.vmem [shape: bf16[256,512], index: 3, kind: input, shape index: {}]
  %s4 = inlined_call_operand.vmem [shape: f32[1,512], index: 4, kind: input, shape index: {}]
  %s5 = inlined_call_operand.vmem [shape: bf16[512,784], index: 5, kind: input, shape index: {}]
  %s6 = inlined_call_operand.vmem [shape: f32[1,784], index: 6, kind: input, shape index: {}]
  %s7 = inlined_call_operand.vmem [shape: bf16[16,784], index: 7, kind: output, shape index: {}]
  %s8 = sld [smem:[#allocation0]]
  $region38: #{decoder_mlp.1} parent=0
    _
  %s10 = ssub.s32 1, %s8
  %s11 = scalar_select 0, %s10, %s8
  // Predicated region
  $region2: #{decoder_mlp.1} parent=0 // pred_check
    _
  $region3: #{decoder_mlp.1} parent=0 // pred_check_branch
    %13 = sbr.rel (0) target = $region5
  $region4: #{decoder_mlp.1} parent=0 // pred_region
    _
  $region5: #{decoder_mlp.1} parent=0 // pred_fallthru
    _
  // Predicated region
  $region6: #{decoder_mlp.1} parent=0 // pred_check
    _
  $region7: #{decoder_mlp.1} parent=0 // pred_check_branch
    %15 = sbr.rel (0) target = $region9
  $region8: #{decoder_mlp.1} parent=0 // pred_region
    _
  $region9: #{decoder_mlp.1} parent=0 // pred_fallthru
    _
  // Predicated region
  $region10: #{decoder_mlp.1} parent=0 // pred_check
    _
  $region11: #{decoder_mlp.1} parent=0 // pred_check_branch
    %17 = sbr.rel (0) target = $region13
  $region12: #{decoder_mlp.1} parent=0 // pred_region
    _
  $region13: #{decoder_mlp.1} parent=0 // pred_fallthru
    _
  // Predicated region
  $region14: #{decoder_mlp.1} parent=0 // pred_check
    _
  $region15: #{decoder_mlp.1} parent=0 // pred_check_branch
    %19 = sbr.rel (0) target = $region17
  $region16: #{decoder_mlp.1} parent=0 // pred_region
    _
  $region17: #{decoder_mlp.1} parent=0 // pred_fallthru
    _
  // Predicated region
  $region18: #{decoder_mlp.1} parent=0 // pred_check
    _
  $region19: #{decoder_mlp.1} parent=0 // pred_check_branch
    %21 = sbr.rel (0) target = $region21
  $region20: #{decoder_mlp.1} parent=0 // pred_region
    _
  $region21: #{decoder_mlp.1} parent=0 // pred_fallthru
    _
  // Predicated region
  $region22: #{decoder_mlp.1} parent=0 // pred_check
    _
  $region23: #{decoder_mlp.1} parent=0 // pred_check_branch
    %23 = sbr.rel (0) target = $region25
  $region24: #{decoder_mlp.1} parent=0 // pred_region
    _
  $region25: #{decoder_mlp.1} parent=0 // pred_fallthru
    _
  // Predicated region
  $region26: #{decoder_mlp.1} parent=0 // pred_check
    _
  $region27: #{decoder_mlp.1} parent=0 // pred_check_branch
    %25 = sbr.rel (0) target = $region29
  $region28: #{decoder_mlp.1} parent=0 // pred_region
    _
  $region29: #{decoder_mlp.1} parent=0 // pred_fallthru
    _
  %v27 = vld [vmem:[%s0] sm:$0xf]
  %v28 = vld [vmem:[%s0 + $0x4] sm:$0xf]
  %v29 = vld [vmem:[%s1] sm:$0xff]
  %v30 = vld [vmem:[%s1 + $0x8] sm:$0xff]
  %v31 = vld [vmem:[%s1 + $0x10] sm:$0xff]
  %v32 = vld [vmem:[%s1 + $0x18] sm:$0xff]
  %v33 = vld [vmem:[%s1 + $0x20] sm:$0xff]
  %v34 = vld [vmem:[%s1 + $0x28] sm:$0xff]
  %v35 = vld [vmem:[%s1 + $0x30] sm:$0xff]
  %v36 = vld [vmem:[%s1 + $0x38] sm:$0xff]
  %v37 = vld [vmem:[%s1 + $0x40] sm:$0xff]
  %v38 = vld [vmem:[%s1 + $0x48] sm:$0xff]
  %v39 = vld [vmem:[%s1 + $0x50] sm:$0xff]
  %v40 = vld [vmem:[%s1 + $0x58] sm:$0xff]
  %v41 = vld [vmem:[%s1 + $0x60] sm:$0xff]
  %v42 = vld [vmem:[%s1 + $0x68] sm:$0xff]
  %v43 = vld [vmem:[%s1 + $0x70] sm:$0xff]
  %v44 = vld [vmem:[%s1 + $0x78] sm:$0xff]
  %v45 = vld [vmem:[%s2] sm:$0x3]
  %v47 = vlaneseq
  %v48 = vshrl.u32 %v47, 7
  %v49 = vsub.s32 0, %v48
  %v50 = vrot.slane %v45, %v49
  %v51 = vlaneseq
  %v52 = vshrl.u32 %v51, 7
  %v53 = vsub.s32 1, %v52
  %v54 = vrot.slane %v45, %v53
  %v59 = vunpack.c.l.b16 %v27
  %v60 = vunpack.c.l.b16 %v28
  %v61 = vpack.c.b16 %v60, %v59
  %v79 = vunpack.c.l.b16 %v29
  %v80 = vunpack.c.h.b16 %v29
  %v81 = vunpack.c.l.b16 %v30
  %v82 = vunpack.c.h.b16 %v30
  %v83 = vunpack.c.l.b16 %v31
  %v84 = vunpack.c.h.b16 %v31
  %v85 = vunpack.c.l.b16 %v32
  %v86 = vunpack.c.h.b16 %v32
  %v87 = vunpack.c.l.b16 %v33
  %v88 = vunpack.c.h.b16 %v33
  %v89 = vunpack.c.l.b16 %v34
  %v90 = vunpack.c.h.b16 %v34
  %v91 = vunpack.c.l.b16 %v35
  %v92 = vunpack.c.h.b16 %v35
  %v93 = vunpack.c.l.b16 %v36
  %v94 = vunpack.c.h.b16 %v36
  %v95 = vunpack.c.l.b16 %v37
  %v96 = vunpack.c.h.b16 %v37
  %v97 = vunpack.c.l.b16 %v38
  %v98 = vunpack.c.h.b16 %v38
  %v99 = vunpack.c.l.b16 %v39
  %v100 = vunpack.c.h.b16 %v39
  %v101 = vunpack.c.l.b16 %v40
  %v102 = vunpack.c.h.b16 %v40
  %v103 = vunpack.c.l.b16 %v41
  %v104 = vunpack.c.h.b16 %v41
  %v105 = vunpack.c.l.b16 %v42
  %v106 = vunpack.c.h.b16 %v42
  %v107 = vunpack.c.l.b16 %v43
  %v108 = vunpack.c.h.b16 %v43
  %v109 = vunpack.c.l.b16 %v44
  %v110 = vunpack.c.h.b16 %v44
  %v111 = vpack.c.b16 %v81, %v79
  %v112 = vpack.c.b16 %v82, %v80
  %v113 = vpack.c.b16 %v85, %v83
  %v114 = vpack.c.b16 %v86, %v84
  %v115 = vpack.c.b16 %v89, %v87
  %v116 = vpack.c.b16 %v90, %v88
  %v117 = vpack.c.b16 %v93, %v91
  %v118 = vpack.c.b16 %v94, %v92
  %v119 = vpack.c.b16 %v97, %v95
  %v120 = vpack.c.b16 %v98, %v96
  %v121 = vpack.c.b16 %v101, %v99
  %v122 = vpack.c.b16 %v102, %v100
  %v123 = vpack.c.b16 %v105, %v103
  %v124 = vpack.c.b16 %v106, %v104
  %v125 = vpack.c.b16 %v109, %v107
  %v126 = vpack.c.b16 %v110, %v108
  %143 = vmatprep.subr.bf16.mxu0 %v112
  %144 = vmatpush1.bf16.msra.mxu0 %v111
  %145 = vmatprep.subr.bf16.mxu0 %v114
  %146 = vmatpush1.bf16.msra.mxu0 %v113
  %147 = vmatprep.subr.bf16.mxu0 %v116
  %148 = vmatpush1.bf16.msra.mxu0 %v115
  %149 = vmatprep.subr.bf16.mxu0 %v118
  %150 = vmatpush1.bf16.msra.mxu0 %v117
  %151 = vmatprep.subr.bf16.mxu0 %v120
  %152 = vmatpush1.bf16.msra.mxu0 %v119
  %153 = vmatprep.subr.bf16.mxu0 %v122
  %154 = vmatpush1.bf16.msra.mxu0 %v121
  %155 = vmatprep.subr.bf16.mxu0 %v124
  %156 = vmatpush1.bf16.msra.mxu0 %v123
  %157 = vmatprep.subr.bf16.mxu0 %v126
  %158 = vmatpush1.bf16.msra.mxu0 %v125
  %159 = vmatprep.subr.bf16.mxu0 0
  %160 = vmatpush1.bf16.msra.mxu0 0
  %161 = vmatprep.subr.bf16.mxu0 0
  %162 = vmatpush1.bf16.msra.mxu0 0
  %163 = vmatprep.subr.bf16.mxu0 0
  %164 = vmatpush1.bf16.msra.mxu0 0
  %165 = vmatprep.subr.bf16.mxu0 0
  %166 = vmatpush1.bf16.msra.mxu0 0
  %167 = vmatprep.subr.bf16.mxu0 0
  %168 = vmatpush1.bf16.msra.mxu0 0
  %169 = vmatprep.subr.bf16.mxu0 0
  %170 = vmatpush1.bf16.msra.mxu0 0
  %171 = vmatprep.subr.bf16.mxu0 0
  %172 = vmatpush1.bf16.msra.mxu0 0
  %173 = vmatprep.subr.bf16.mxu0 0
  %174 = vmatpush1.bf16.msra.mxu0 0
  %175 = vmatprep.mubr.bf16.mxu0 0
  %176 = vmatmul.mubr.bf16.gmra.mrb[0].mxu0 %v61
  %v177 = vpop.f32.mrb[0].mxu0
  %v178 = vadd.f32 %v50, %v177
  %v179 = vpop.f32.mrb[0].mxu0
  %v180 = vadd.f32 %v54, %v179
  %v181 = vpop.f32.mrb[0].mxu0
  %v182 = vadd.f32 %v50, %v181
  %v183 = vpop.f32.mrb[0].mxu0
  %v184 = vadd.f32 %v54, %v183
  %185 = vdwg.mxu0
  %v186 = vmax.f32 %v178, 0.0
  %v187 = vmax.f32 %v180, 0.0
  %v188 = vmax.f32 %v182, 0.0
  %v189 = vmax.f32 %v184, 0.0
  %v190 = vpack.c.bf16 %v188, %v186
  %v191 = vpack.c.bf16 %v189, %v187
  %192 = vst [vmem:[#allocation2] sm:$0xff] %v190
  %193 = vst [vmem:[#allocation2 + $0x8] sm:$0xff] %v191
  %v194 = vld [vmem:[#allocation2] sm:$0xff]
  %v195 = vld [vmem:[#allocation2 + $0x8] sm:$0xff]
  %v196 = vld [vmem:[%s3] sm:$0xff]
  %v197 = vld [vmem:[%s3 + $0x8] sm:$0xff]
  %v198 = vld [vmem:[%s3 + $0x10] sm:$0xff]
  %v199 = vld [vmem:[%s3 + $0x18] sm:$0xff]
  %v200 = vld [vmem:[%s3 + $0x20] sm:$0xff]
  %v201 = vld [vmem:[%s3 + $0x28] sm:$0xff]
  %v202 = vld [vmem:[%s3 + $0x30] sm:$0xff]
  %v203 = vld [vmem:[%s3 + $0x38] sm:$0xff]
  %v204 = vld [vmem:[%s3 + $0x40] sm:$0xff]
  %v205 = vld [vmem:[%s3 + $0x48] sm:$0xff]
  %v206 = vld [vmem:[%s3 + $0x50] sm:$0xff]
  %v207 = vld [vmem:[%s3 + $0x58] sm:$0xff]
  %v208 = vld [vmem:[%s3 + $0x60] sm:$0xff]
  %v209 = vld [vmem:[%s3 + $0x68] sm:$0xff]
  %v210 = vld [vmem:[%s3 + $0x70] sm:$0xff]
  %v211 = vld [vmem:[%s3 + $0x78] sm:$0xff]
  %v212 = vld [vmem:[%s3 + $0x80] sm:$0xff]
  %v213 = vld [vmem:[%s3 + $0x88] sm:$0xff]
  %v214 = vld [vmem:[%s3 + $0x90] sm:$0xff]
  %v215 = vld [vmem:[%s3 + $0x98] sm:$0xff]
  %v216 = vld [vmem:[%s3 + $0xa0] sm:$0xff]
  %v217 = vld [vmem:[%s3 + $0xa8] sm:$0xff]
  %v218 = vld [vmem:[%s3 + $0xb0] sm:$0xff]
  %v219 = vld [vmem:[%s3 + $0xb8] sm:$0xff]
  %v220 = vld [vmem:[%s3 + $0xc0] sm:$0xff]
  %v221 = vld [vmem:[%s3 + $0xc8] sm:$0xff]
  %v222 = vld [vmem:[%s3 + $0xd0] sm:$0xff]
  %v223 = vld [vmem:[%s3 + $0xd8] sm:$0xff]
  %v224 = vld [vmem:[%s3 + $0xe0] sm:$0xff]
  %v225 = vld [vmem:[%s3 + $0xe8] sm:$0xff]
  %v226 = vld [vmem:[%s3 + $0xf0] sm:$0xff]
  %v227 = vld [vmem:[%s3 + $0xf8] sm:$0xff]
  %v228 = vld [vmem:[%s3 + $0x100] sm:$0xff]
  %v229 = vld [vmem:[%s3 + $0x108] sm:$0xff]
  %v230 = vld [vmem:[%s3 + $0x110] sm:$0xff]
  %v231 = vld [vmem:[%s3 + $0x118] sm:$0xff]
  %v232 = vld [vmem:[%s3 + $0x120] sm:$0xff]
  %v233 = vld [vmem:[%s3 + $0x128] sm:$0xff]
  %v234 = vld [vmem:[%s3 + $0x130] sm:$0xff]
  %v235 = vld [vmem:[%s3 + $0x138] sm:$0xff]
  %v236 = vld [vmem:[%s3 + $0x140] sm:$0xff]
  %v237 = vld [vmem:[%s3 + $0x148] sm:$0xff]
  %v238 = vld [vmem:[%s3 + $0x150] sm:$0xff]
  %v239 = vld [vmem:[%s3 + $0x158] sm:$0xff]
  %v240 = vld [vmem:[%s3 + $0x160] sm:$0xff]
  %v241 = vld [vmem:[%s3 + $0x168] sm:$0xff]
  %v242 = vld [vmem:[%s3 + $0x170] sm:$0xff]
  %v243 = vld [vmem:[%s3 + $0x178] sm:$0xff]
  %v244 = vld [vmem:[%s3 + $0x180] sm:$0xff]
  %v245 = vld [vmem:[%s3 + $0x188] sm:$0xff]
  %v246 = vld [vmem:[%s3 + $0x190] sm:$0xff]
  %v247 = vld [vmem:[%s3 + $0x198] sm:$0xff]
  %v248 = vld [vmem:[%s3 + $0x1a0] sm:$0xff]
  %v249 = vld [vmem:[%s3 + $0x1a8] sm:$0xff]
  %v250 = vld [vmem:[%s3 + $0x1b0] sm:$0xff]
  %v251 = vld [vmem:[%s3 + $0x1b8] sm:$0xff]
  %v252 = vld [vmem:[%s3 + $0x1c0] sm:$0xff]
  %v253 = vld [vmem:[%s3 + $0x1c8] sm:$0xff]
  %v254 = vld [vmem:[%s3 + $0x1d0] sm:$0xff]
  %v255 = vld [vmem:[%s3 + $0x1d8] sm:$0xff]
  %v256 = vld [vmem:[%s3 + $0x1e0] sm:$0xff]
  %v257 = vld [vmem:[%s3 + $0x1e8] sm:$0xff]
  %v258 = vld [vmem:[%s3 + $0x1f0] sm:$0xff]
  %v259 = vld [vmem:[%s3 + $0x1f8] sm:$0xff]
  %v260 = vld [vmem:[%s4] sm:$0xf]
  %v262 = vlaneseq
  %v263 = vshrl.u32 %v262, 7
  %v264 = vsub.s32 0, %v263
  %v265 = vrot.slane %v260, %v264
  %v266 = vlaneseq
  %v267 = vshrl.u32 %v266, 7
  %v268 = vsub.s32 1, %v267
  %v269 = vrot.slane %v260, %v268
  %v270 = vlaneseq
  %v271 = vshrl.u32 %v270, 7
  %v272 = vsub.s32 2, %v271
  %v273 = vrot.slane %v260, %v272
  %v274 = vlaneseq
  %v275 = vshrl.u32 %v274, 7
  %v276 = vsub.s32 3, %v275
  %v277 = vrot.slane %v260, %v276
  %v346 = vunpack.c.l.b16 %v196
  %v347 = vunpack.c.h.b16 %v196
  %v348 = vunpack.c.l.b16 %v197
  %v349 = vunpack.c.h.b16 %v197
  %v350 = vunpack.c.l.b16 %v198
  %v351 = vunpack.c.h.b16 %v198
  %v352 = vunpack.c.l.b16 %v199
  %v353 = vunpack.c.h.b16 %v199
  %v354 = vunpack.c.l.b16 %v200
  %v355 = vunpack.c.h.b16 %v200
  %v356 = vunpack.c.l.b16 %v201
  %v357 = vunpack.c.h.b16 %v201
  %v358 = vunpack.c.l.b16 %v202
  %v359 = vunpack.c.h.b16 %v202
  %v360 = vunpack.c.l.b16 %v203
  %v361 = vunpack.c.h.b16 %v203
  %v362 = vunpack.c.l.b16 %v204
  %v363 = vunpack.c.h.b16 %v204
  %v364 = vunpack.c.l.b16 %v205
  %v365 = vunpack.c.h.b16 %v205
  %v366 = vunpack.c.l.b16 %v206
  %v367 = vunpack.c.h.b16 %v206
  %v368 = vunpack.c.l.b16 %v207
  %v369 = vunpack.c.h.b16 %v207
  %v370 = vunpack.c.l.b16 %v208
  %v371 = vunpack.c.h.b16 %v208
  %v372 = vunpack.c.l.b16 %v209
  %v373 = vunpack.c.h.b16 %v209
  %v374 = vunpack.c.l.b16 %v210
  %v375 = vunpack.c.h.b16 %v210
  %v376 = vunpack.c.l.b16 %v211
  %v377 = vunpack.c.h.b16 %v211
  %v378 = vunpack.c.l.b16 %v212
  %v379 = vunpack.c.h.b16 %v212
  %v380 = vunpack.c.l.b16 %v213
  %v381 = vunpack.c.h.b16 %v213
  %v382 = vunpack.c.l.b16 %v214
  %v383 = vunpack.c.h.b16 %v214
  %v384 = vunpack.c.l.b16 %v215
  %v385 = vunpack.c.h.b16 %v215
  %v386 = vunpack.c.l.b16 %v216
  %v387 = vunpack.c.h.b16 %v216
  %v388 = vunpack.c.l.b16 %v217
  %v389 = vunpack.c.h.b16 %v217
  %v390 = vunpack.c.l.b16 %v218
  %v391 = vunpack.c.h.b16 %v218
  %v392 = vunpack.c.l.b16 %v219
  %v393 = vunpack.c.h.b16 %v219
  %v394 = vunpack.c.l.b16 %v220
  %v395 = vunpack.c.h.b16 %v220
  %v396 = vunpack.c.l.b16 %v221
  %v397 = vunpack.c.h.b16 %v221
  %v398 = vunpack.c.l.b16 %v222
  %v399 = vunpack.c.h.b16 %v222
  %v400 = vunpack.c.l.b16 %v223
  %v401 = vunpack.c.h.b16 %v223
  %v402 = vunpack.c.l.b16 %v224
  %v403 = vunpack.c.h.b16 %v224
  %v404 = vunpack.c.l.b16 %v225
  %v405 = vunpack.c.h.b16 %v225
  %v406 = vunpack.c.l.b16 %v226
  %v407 = vunpack.c.h.b16 %v226
  %v408 = vunpack.c.l.b16 %v227
  %v409 = vunpack.c.h.b16 %v227
  %v410 = vunpack.c.l.b16 %v228
  %v411 = vunpack.c.h.b16 %v228
  %v412 = vunpack.c.l.b16 %v229
  %v413 = vunpack.c.h.b16 %v229
  %v414 = vunpack.c.l.b16 %v230
  %v415 = vunpack.c.h.b16 %v230
  %v416 = vunpack.c.l.b16 %v231
  %v417 = vunpack.c.h.b16 %v231
  %v418 = vunpack.c.l.b16 %v232
  %v419 = vunpack.c.h.b16 %v232
  %v420 = vunpack.c.l.b16 %v233
  %v421 = vunpack.c.h.b16 %v233
  %v422 = vunpack.c.l.b16 %v234
  %v423 = vunpack.c.h.b16 %v234
  %v424 = vunpack.c.l.b16 %v235
  %v425 = vunpack.c.h.b16 %v235
  %v426 = vunpack.c.l.b16 %v236
  %v427 = vunpack.c.h.b16 %v236
  %v428 = vunpack.c.l.b16 %v237
  %v429 = vunpack.c.h.b16 %v237
  %v430 = vunpack.c.l.b16 %v238
  %v431 = vunpack.c.h.b16 %v238
  %v432 = vunpack.c.l.b16 %v239
  %v433 = vunpack.c.h.b16 %v239
  %v434 = vunpack.c.l.b16 %v240
  %v435 = vunpack.c.h.b16 %v240
  %v436 = vunpack.c.l.b16 %v241
  %v437 = vunpack.c.h.b16 %v241
  %v438 = vunpack.c.l.b16 %v242
  %v439 = vunpack.c.h.b16 %v242
  %v440 = vunpack.c.l.b16 %v243
  %v441 = vunpack.c.h.b16 %v243
  %v442 = vunpack.c.l.b16 %v244
  %v443 = vunpack.c.h.b16 %v244
  %v444 = vunpack.c.l.b16 %v245
  %v445 = vunpack.c.h.b16 %v245
  %v446 = vunpack.c.l.b16 %v246
  %v447 = vunpack.c.h.b16 %v246
  %v448 = vunpack.c.l.b16 %v247
  %v449 = vunpack.c.h.b16 %v247
  %v450 = vunpack.c.l.b16 %v248
  %v451 = vunpack.c.h.b16 %v248
  %v452 = vunpack.c.l.b16 %v249
  %v453 = vunpack.c.h.b16 %v249
  %v454 = vunpack.c.l.b16 %v250
  %v455 = vunpack.c.h.b16 %v250
  %v456 = vunpack.c.l.b16 %v251
  %v457 = vunpack.c.h.b16 %v251
  %v458 = vunpack.c.l.b16 %v252
  %v459 = vunpack.c.h.b16 %v252
  %v460 = vunpack.c.l.b16 %v253
  %v461 = vunpack.c.h.b16 %v253
  %v462 = vunpack.c.l.b16 %v254
  %v463 = vunpack.c.h.b16 %v254
  %v464 = vunpack.c.l.b16 %v255
  %v465 = vunpack.c.h.b16 %v255
  %v466 = vunpack.c.l.b16 %v256
  %v467 = vunpack.c.h.b16 %v256
  %v468 = vunpack.c.l.b16 %v257
  %v469 = vunpack.c.h.b16 %v257
  %v470 = vunpack.c.l.b16 %v258
  %v471 = vunpack.c.h.b16 %v258
  %v472 = vunpack.c.l.b16 %v259
  %v473 = vunpack.c.h.b16 %v259
  %v474 = vpack.c.b16 %v350, %v346
  %v475 = vpack.c.b16 %v351, %v347
  %v476 = vpack.c.b16 %v352, %v348
  %v477 = vpack.c.b16 %v353, %v349
  %v478 = vpack.c.b16 %v358, %v354
  %v479 = vpack.c.b16 %v359, %v355
  %v480 = vpack.c.b16 %v360, %v356
  %v481 = vpack.c.b16 %v361, %v357
  %v482 = vpack.c.b16 %v366, %v362
  %v483 = vpack.c.b16 %v367, %v363
  %v484 = vpack.c.b16 %v368, %v364
  %v485 = vpack.c.b16 %v369, %v365
  %v486 = vpack.c.b16 %v374, %v370
  %v487 = vpack.c.b16 %v375, %v371
  %v488 = vpack.c.b16 %v376, %v372
  %v489 = vpack.c.b16 %v377, %v373
  %v490 = vpack.c.b16 %v382, %v378
  %v491 = vpack.c.b16 %v383, %v379
  %v492 = vpack.c.b16 %v384, %v380
  %v493 = vpack.c.b16 %v385, %v381
  %v494 = vpack.c.b16 %v390, %v386
  %v495 = vpack.c.b16 %v391, %v387
  %v496 = vpack.c.b16 %v392, %v388
  %v497 = vpack.c.b16 %v393, %v389
  %v498 = vpack.c.b16 %v398, %v394
  %v499 = vpack.c.b16 %v399, %v395
  %v500 = vpack.c.b16 %v400, %v396
  %v501 = vpack.c.b16 %v401, %v397
  %v502 = vpack.c.b16 %v406, %v402
  %v503 = vpack.c.b16 %v407, %v403
  %v504 = vpack.c.b16 %v408, %v404
  %v505 = vpack.c.b16 %v409, %v405
  %v506 = vpack.c.b16 %v414, %v410
  %v507 = vpack.c.b16 %v415, %v411
  %v508 = vpack.c.b16 %v416, %v412
  %v509 = vpack.c.b16 %v417, %v413
  %v510 = vpack.c.b16 %v422, %v418
  %v511 = vpack.c.b16 %v423, %v419
  %v512 = vpack.c.b16 %v424, %v420
  %v513 = vpack.c.b16 %v425, %v421
  %v514 = vpack.c.b16 %v430, %v426
  %v515 = vpack.c.b16 %v431, %v427
  %v516 = vpack.c.b16 %v432, %v428
  %v517 = vpack.c.b16 %v433, %v429
  %v518 = vpack.c.b16 %v438, %v434
  %v519 = vpack.c.b16 %v439, %v435
  %v520 = vpack.c.b16 %v440, %v436
  %v521 = vpack.c.b16 %v441, %v437
  %v522 = vpack.c.b16 %v446, %v442
  %v523 = vpack.c.b16 %v447, %v443
  %v524 = vpack.c.b16 %v448, %v444
  %v525 = vpack.c.b16 %v449, %v445
  %v526 = vpack.c.b16 %v454, %v450
  %v527 = vpack.c.b16 %v455, %v451
  %v528 = vpack.c.b16 %v456, %v452
  %v529 = vpack.c.b16 %v457, %v453
  %v530 = vpack.c.b16 %v462, %v458
  %v531 = vpack.c.b16 %v463, %v459
  %v532 = vpack.c.b16 %v464, %v460
  %v533 = vpack.c.b16 %v465, %v461
  %v534 = vpack.c.b16 %v470, %v466
  %v535 = vpack.c.b16 %v471, %v467
  %v536 = vpack.c.b16 %v472, %v468
  %v537 = vpack.c.b16 %v473, %v469
  %602 = vmatprep.subr.bf16.mxu0 %v475
  %603 = vmatpush1.bf16.msra.mxu0 %v474
  %604 = vmatprep.subr.bf16.mxu0 %v479
  %605 = vmatpush1.bf16.msra.mxu0 %v478
  %606 = vmatprep.subr.bf16.mxu0 %v483
  %607 = vmatpush1.bf16.msra.mxu0 %v482
  %608 = vmatprep.subr.bf16.mxu0 %v487
  %609 = vmatpush1.bf16.msra.mxu0 %v486
  %610 = vmatprep.subr.bf16.mxu0 %v491
  %611 = vmatpush1.bf16.msra.mxu0 %v490
  %612 = vmatprep.subr.bf16.mxu0 %v495
  %613 = vmatpush1.bf16.msra.mxu0 %v494
  %614 = vmatprep.subr.bf16.mxu0 %v499
  %615 = vmatpush1.bf16.msra.mxu0 %v498
  %616 = vmatprep.subr.bf16.mxu0 %v503
  %617 = vmatpush1.bf16.msra.mxu0 %v502
  %618 = vmatprep.subr.bf16.mxu0 %v507
  %619 = vmatpush1.bf16.msra.mxu0 %v506
  %620 = vmatprep.subr.bf16.mxu0 %v511
  %621 = vmatpush1.bf16.msra.mxu0 %v510
  %622 = vmatprep.subr.bf16.mxu0 %v515
  %623 = vmatpush1.bf16.msra.mxu0 %v514
  %624 = vmatprep.subr.bf16.mxu0 %v519
  %625 = vmatpush1.bf16.msra.mxu0 %v518
  %626 = vmatprep.subr.bf16.mxu0 %v523
  %627 = vmatpush1.bf16.msra.mxu0 %v522
  %628 = vmatprep.subr.bf16.mxu0 %v527
  %629 = vmatpush1.bf16.msra.mxu0 %v526
  %630 = vmatprep.subr.bf16.mxu0 %v531
  %631 = vmatpush1.bf16.msra.mxu0 %v530
  %632 = vmatprep.subr.bf16.mxu0 %v535
  %633 = vmatpush1.bf16.msra.mxu0 %v534
  %634 = vmatprep.mubr.bf16.mxu0 %v195
  %635 = vmatmul.mubr.bf16.gmra.mrb[0].mxu0 %v194
  %v636 = vpop.f32.mrb[0].mxu0
  %v637 = vadd.f32 %v265, %v636
  %v638 = vpop.f32.mrb[0].mxu0
  %v639 = vadd.f32 %v269, %v638
  %v640 = vpop.f32.mrb[0].mxu0
  %v641 = vadd.f32 %v265, %v640
  %v642 = vpop.f32.mrb[0].mxu0
  %v643 = vadd.f32 %v269, %v642
  %644 = vdwg.mxu0
  %645 = vmatprep.subr.bf16.mxu0 %v477
  %646 = vmatpush1.bf16.msra.mxu0 %v476
  %647 = vmatprep.subr.bf16.mxu0 %v481
  %648 = vmatpush1.bf16.msra.mxu0 %v480
  %649 = vmatprep.subr.bf16.mxu0 %v485
  %650 = vmatpush1.bf16.msra.mxu0 %v484
  %651 = vmatprep.subr.bf16.mxu0 %v489
  %652 = vmatpush1.bf16.msra.mxu0 %v488
  %653 = vmatprep.subr.bf16.mxu0 %v493
  %654 = vmatpush1.bf16.msra.mxu0 %v492
  %655 = vmatprep.subr.bf16.mxu0 %v497
  %656 = vmatpush1.bf16.msra.mxu0 %v496
  %657 = vmatprep.subr.bf16.mxu0 %v501
  %658 = vmatpush1.bf16.msra.mxu0 %v500
  %659 = vmatprep.subr.bf16.mxu0 %v505
  %660 = vmatpush1.bf16.msra.mxu0 %v504
  %661 = vmatprep.subr.bf16.mxu0 %v509
  %662 = vmatpush1.bf16.msra.mxu0 %v508
  %663 = vmatprep.subr.bf16.mxu0 %v513
  %664 = vmatpush1.bf16.msra.mxu0 %v512
  %665 = vmatprep.subr.bf16.mxu0 %v517
  %666 = vmatpush1.bf16.msra.mxu0 %v516
  %667 = vmatprep.subr.bf16.mxu0 %v521
  %668 = vmatpush1.bf16.msra.mxu0 %v520
  %669 = vmatprep.subr.bf16.mxu0 %v525
  %670 = vmatpush1.bf16.msra.mxu0 %v524
  %671 = vmatprep.subr.bf16.mxu0 %v529
  %672 = vmatpush1.bf16.msra.mxu0 %v528
  %673 = vmatprep.subr.bf16.mxu0 %v533
  %674 = vmatpush1.bf16.msra.mxu0 %v532
  %675 = vmatprep.subr.bf16.mxu0 %v537
  %676 = vmatpush1.bf16.msra.mxu0 %v536
  %677 = vmatprep.mubr.bf16.mxu0 %v195
  %678 = vmatmul.mubr.bf16.gmra.mrb[0].mxu0 %v194
  %v679 = vpop.f32.mrb[0].mxu0
  %v680 = vadd.f32 %v273, %v679
  %v681 = vpop.f32.mrb[0].mxu0
  %v682 = vadd.f32 %v277, %v681
  %v683 = vpop.f32.mrb[0].mxu0
  %v684 = vadd.f32 %v273, %v683
  %v685 = vpop.f32.mrb[0].mxu0
  %v686 = vadd.f32 %v277, %v685
  %687 = vdwg.mxu0
  %v688 = vmax.f32 %v637, 0.0
  %v689 = vmax.f32 %v639, 0.0
  %v690 = vmax.f32 %v680, 0.0
  %v691 = vmax.f32 %v682, 0.0
  %v692 = vmax.f32 %v641, 0.0
  %v693 = vmax.f32 %v643, 0.0
  %v694 = vmax.f32 %v684, 0.0
  %v695 = vmax.f32 %v686, 0.0
  %v696 = vpack.c.bf16 %v692, %v688
  %v697 = vpack.c.bf16 %v693, %v689
  %v698 = vpack.c.bf16 %v694, %v690
  %v699 = vpack.c.bf16 %v695, %v691
  %700 = vst [vmem:[#allocation3] sm:$0xff] %v696
  %701 = vst [vmem:[#allocation3 + $0x8] sm:$0xff] %v697
  %702 = vst [vmem:[#allocation3 + $0x10] sm:$0xff] %v698
  %703 = vst [vmem:[#allocation3 + $0x18] sm:$0xff] %v699
  %v704 = vld [vmem:[#allocation3] sm:$0xff]
  %v705 = vld [vmem:[#allocation3 + $0x8] sm:$0xff]
  %v706 = vld [vmem:[#allocation3 + $0x10] sm:$0xff]
  %v707 = vld [vmem:[#allocation3 + $0x18] sm:$0xff]
  %v708 = vld [vmem:[%s5] sm:$0xff]
  %v709 = vld [vmem:[%s5 + $0x8] sm:$0xff]
  %v710 = vld [vmem:[%s5 + $0x10] sm:$0xff]
  %v711 = vld [vmem:[%s5 + $0x18] sm:$0xf]
  %v712 = vld [vmem:[%s5 + $0x1c] sm:$0xff]
  %v713 = vld [vmem:[%s5 + $0x24] sm:$0xff]
  %v714 = vld [vmem:[%s5 + $0x2c] sm:$0xff]
  %v715 = vld [vmem:[%s5 + $0x34] sm:$0xf]
  %v716 = vld [vmem:[%s5 + $0x38] sm:$0xff]
  %v717 = vld [vmem:[%s5 + $0x40] sm:$0xff]
  %v718 = vld [vmem:[%s5 + $0x48] sm:$0xff]
  %v719 = vld [vmem:[%s5 + $0x50] sm:$0xf]
  %v720 = vld [vmem:[%s5 + $0x54] sm:$0xff]
  %v721 = vld [vmem:[%s5 + $0x5c] sm:$0xff]
  %v722 = vld [vmem:[%s5 + $0x64] sm:$0xff]
  %v723 = vld [vmem:[%s5 + $0x6c] sm:$0xf]
  %v724 = vld [vmem:[%s5 + $0x70] sm:$0xff]
  %v725 = vld [vmem:[%s5 + $0x78] sm:$0xff]
  %v726 = vld [vmem:[%s5 + $0x80] sm:$0xff]
  %v727 = vld [vmem:[%s5 + $0x88] sm:$0xf]
  %v728 = vld [vmem:[%s5 + $0x8c] sm:$0xff]
  %v729 = vld [vmem:[%s5 + $0x94] sm:$0xff]
  %v730 = vld [vmem:[%s5 + $0x9c] sm:$0xff]
  %v731 = vld [vmem:[%s5 + $0xa4] sm:$0xf]
  %v732 = vld [vmem:[%s5 + $0xa8] sm:$0xff]
  %v733 = vld [vmem:[%s5 + $0xb0] sm:$0xff]
  %v734 = vld [vmem:[%s5 + $0xb8] sm:$0xff]
  %v735 = vld [vmem:[%s5 + $0xc0] sm:$0xf]
  %v736 = vld [vmem:[%s5 + $0xc4] sm:$0xff]
  %v737 = vld [vmem:[%s5 + $0xcc] sm:$0xff]
  %v738 = vld [vmem:[%s5 + $0xd4] sm:$0xff]
  %v739 = vld [vmem:[%s5 + $0xdc] sm:$0xf]
  %v740 = vld [vmem:[%s5 + $0xe0] sm:$0xff]
  %v741 = vld [vmem:[%s5 + $0xe8] sm:$0xff]
  %v742 = vld [vmem:[%s5 + $0xf0] sm:$0xff]
  %v743 = vld [vmem:[%s5 + $0xf8] sm:$0xf]
  %v744 = vld [vmem:[%s5 + $0xfc] sm:$0xff]
  %v745 = vld [vmem:[%s5 + $0x104] sm:$0xff]
  %v746 = vld [vmem:[%s5 + $0x10c] sm:$0xff]
  %v747 = vld [vmem:[%s5 + $0x114] sm:$0xf]
  %v748 = vld [vmem:[%s5 + $0x118] sm:$0xff]
  %v749 = vld [vmem:[%s5 + $0x120] sm:$0xff]
  %v750 = vld [vmem:[%s5 + $0x128] sm:$0xff]
  %v751 = vld [vmem:[%s5 + $0x130] sm:$0xf]
  %v752 = vld [vmem:[%s5 + $0x134] sm:$0xff]
  %v753 = vld [vmem:[%s5 + $0x13c] sm:$0xff]
  %v754 = vld [vmem:[%s5 + $0x144] sm:$0xff]
  %v755 = vld [vmem:[%s5 + $0x14c] sm:$0xf]
  %v756 = vld [vmem:[%s5 + $0x150] sm:$0xff]
  %v757 = vld [vmem:[%s5 + $0x158] sm:$0xff]
  %v758 = vld [vmem:[%s5 + $0x160] sm:$0xff]
  %v759 = vld [vmem:[%s5 + $0x168] sm:$0xf]
  %v760 = vld [vmem:[%s5 + $0x16c] sm:$0xff]
  %v761 = vld [vmem:[%s5 + $0x174] sm:$0xff]
  %v762 = vld [vmem:[%s5 + $0x17c] sm:$0xff]
  %v763 = vld [vmem:[%s5 + $0x184] sm:$0xf]
  %v764 = vld [vmem:[%s5 + $0x188] sm:$0xff]
  %v765 = vld [vmem:[%s5 + $0x190] sm:$0xff]
  %v766 = vld [vmem:[%s5 + $0x198] sm:$0xff]
  %v767 = vld [vmem:[%s5 + $0x1a0] sm:$0xf]
  %v768 = vld [vmem:[%s5 + $0x1a4] sm:$0xff]
  %v769 = vld [vmem:[%s5 + $0x1ac] sm:$0xff]
  %v770 = vld [vmem:[%s5 + $0x1b4] sm:$0xff]
  %v771 = vld [vmem:[%s5 + $0x1bc] sm:$0xf]
  %v772 = vld [vmem:[%s5 + $0x1c0] sm:$0xff]
  %v773 = vld [vmem:[%s5 + $0x1c8] sm:$0xff]
  %v774 = vld [vmem:[%s5 + $0x1d0] sm:$0xff]
  %v775 = vld [vmem:[%s5 + $0x1d8] sm:$0xf]
  %v776 = vld [vmem:[%s5 + $0x1dc] sm:$0xff]
  %v777 = vld [vmem:[%s5 + $0x1e4] sm:$0xff]
  %v778 = vld [vmem:[%s5 + $0x1ec] sm:$0xff]
  %v779 = vld [vmem:[%s5 + $0x1f4] sm:$0xf]
  %v780 = vld [vmem:[%s5 + $0x1f8] sm:$0xff]
  %v781 = vld [vmem:[%s5 + $0x200] sm:$0xff]
  %v782 = vld [vmem:[%s5 + $0x208] sm:$0xff]
  %v783 = vld [vmem:[%s5 + $0x210] sm:$0xf]
  %v784 = vld [vmem:[%s5 + $0x214] sm:$0xff]
  %v785 = vld [vmem:[%s5 + $0x21c] sm:$0xff]
  %v786 = vld [vmem:[%s5 + $0x224] sm:$0xff]
  %v787 = vld [vmem:[%s5 + $0x22c] sm:$0xf]
  %v788 = vld [vmem:[%s5 + $0x230] sm:$0xff]
  %v789 = vld [vmem:[%s5 + $0x238] sm:$0xff]
  %v790 = vld [vmem:[%s5 + $0x240] sm:$0xff]
  %v791 = vld [vmem:[%s5 + $0x248] sm:$0xf]
  %v792 = vld [vmem:[%s5 + $0x24c] sm:$0xff]
  %v793 = vld [vmem:[%s5 + $0x254] sm:$0xff]
  %v794 = vld [vmem:[%s5 + $0x25c] sm:$0xff]
  %v795 = vld [vmem:[%s5 + $0x264] sm:$0xf]
  %v796 = vld [vmem:[%s5 + $0x268] sm:$0xff]
  %v797 = vld [vmem:[%s5 + $0x270] sm:$0xff]
  %v798 = vld [vmem:[%s5 + $0x278] sm:$0xff]
  %v799 = vld [vmem:[%s5 + $0x280] sm:$0xf]
  %v800 = vld [vmem:[%s5 + $0x284] sm:$0xff]
  %v801 = vld [vmem:[%s5 + $0x28c] sm:$0xff]
  %v802 = vld [vmem:[%s5 + $0x294] sm:$0xff]
  %v803 = vld [vmem:[%s5 + $0x29c] sm:$0xf]
  %v804 = vld [vmem:[%s5 + $0x2a0] sm:$0xff]
  %v805 = vld [vmem:[%s5 + $0x2a8] sm:$0xff]
  %v806 = vld [vmem:[%s5 + $0x2b0] sm:$0xff]
  %v807 = vld [vmem:[%s5 + $0x2b8] sm:$0xf]
  %v808 = vld [vmem:[%s5 + $0x2bc] sm:$0xff]
  %v809 = vld [vmem:[%s5 + $0x2c4] sm:$0xff]
  %v810 = vld [vmem:[%s5 + $0x2cc] sm:$0xff]
  %v811 = vld [vmem:[%s5 + $0x2d4] sm:$0xf]
  %v812 = vld [vmem:[%s5 + $0x2d8] sm:$0xff]
  %v813 = vld [vmem:[%s5 + $0x2e0] sm:$0xff]
  %v814 = vld [vmem:[%s5 + $0x2e8] sm:$0xff]
  %v815 = vld [vmem:[%s5 + $0x2f0] sm:$0xf]
  %v816 = vld [vmem:[%s5 + $0x2f4] sm:$0xff]
  %v817 = vld [vmem:[%s5 + $0x2fc] sm:$0xff]
  %v818 = vld [vmem:[%s5 + $0x304] sm:$0xff]
  %v819 = vld [vmem:[%s5 + $0x30c] sm:$0xf]
  %v820 = vld [vmem:[%s5 + $0x310] sm:$0xff]
  %v821 = vld [vmem:[%s5 + $0x318] sm:$0xff]
  %v822 = vld [vmem:[%s5 + $0x320] sm:$0xff]
  %v823 = vld [vmem:[%s5 + $0x328] sm:$0xf]
  %v824 = vld [vmem:[%s5 + $0x32c] sm:$0xff]
  %v825 = vld [vmem:[%s5 + $0x334] sm:$0xff]
  %v826 = vld [vmem:[%s5 + $0x33c] sm:$0xff]
  %v827 = vld [vmem:[%s5 + $0x344] sm:$0xf]
  %v828 = vld [vmem:[%s5 + $0x348] sm:$0xff]
  %v829 = vld [vmem:[%s5 + $0x350] sm:$0xff]
  %v830 = vld [vmem:[%s5 + $0x358] sm:$0xff]
  %v831 = vld [vmem:[%s5 + $0x360] sm:$0xf]
  %v832 = vld [vmem:[%s5 + $0x364] sm:$0xff]
  %v833 = vld [vmem:[%s5 + $0x36c] sm:$0xff]
  %v834 = vld [vmem:[%s5 + $0x374] sm:$0xff]
  %v835 = vld [vmem:[%s5 + $0x37c] sm:$0xf]
  %v836 = vld [vmem:[%s5 + $0x380] sm:$0xff]
  %v837 = vld [vmem:[%s5 + $0x388] sm:$0xff]
  %v838 = vld [vmem:[%s5 + $0x390] sm:$0xff]
  %v839 = vld [vmem:[%s5 + $0x398] sm:$0xf]
  %v840 = vld [vmem:[%s5 + $0x39c] sm:$0xff]
  %v841 = vld [vmem:[%s5 + $0x3a4] sm:$0xff]
  %v842 = vld [vmem:[%s5 + $0x3ac] sm:$0xff]
  %v843 = vld [vmem:[%s5 + $0x3b4] sm:$0xf]
  %v844 = vld [vmem:[%s5 + $0x3b8] sm:$0xff]
  %v845 = vld [vmem:[%s5 + $0x3c0] sm:$0xff]
  %v846 = vld [vmem:[%s5 + $0x3c8] sm:$0xff]
  %v847 = vld [vmem:[%s5 + $0x3d0] sm:$0xf]
  %v848 = vld [vmem:[%s5 + $0x3d4] sm:$0xff]
  %v849 = vld [vmem:[%s5 + $0x3dc] sm:$0xff]
  %v850 = vld [vmem:[%s5 + $0x3e4] sm:$0xff]
  %v851 = vld [vmem:[%s5 + $0x3ec] sm:$0xf]
  %v852 = vld [vmem:[%s5 + $0x3f0] sm:$0xff]
  %v853 = vld [vmem:[%s5 + $0x3f8] sm:$0xff]
  %v854 = vld [vmem:[%s5 + $0x400] sm:$0xff]
  %v855 = vld [vmem:[%s5 + $0x408] sm:$0xf]
  %v856 = vld [vmem:[%s5 + $0x40c] sm:$0xff]
  %v857 = vld [vmem:[%s5 + $0x414] sm:$0xff]
  %v858 = vld [vmem:[%s5 + $0x41c] sm:$0xff]
  %v859 = vld [vmem:[%s5 + $0x424] sm:$0xf]
  %v860 = vld [vmem:[%s5 + $0x428] sm:$0xff]
  %v861 = vld [vmem:[%s5 + $0x430] sm:$0xff]
  %v862 = vld [vmem:[%s5 + $0x438] sm:$0xff]
  %v863 = vld [vmem:[%s5 + $0x440] sm:$0xf]
  %v864 = vld [vmem:[%s5 + $0x444] sm:$0xff]
  %v865 = vld [vmem:[%s5 + $0x44c] sm:$0xff]
  %v866 = vld [vmem:[%s5 + $0x454] sm:$0xff]
  %v867 = vld [vmem:[%s5 + $0x45c] sm:$0xf]
  %v868 = vld [vmem:[%s5 + $0x460] sm:$0xff]
  %v869 = vld [vmem:[%s5 + $0x468] sm:$0xff]
  %v870 = vld [vmem:[%s5 + $0x470] sm:$0xff]
  %v871 = vld [vmem:[%s5 + $0x478] sm:$0xf]
  %v872 = vld [vmem:[%s5 + $0x47c] sm:$0xff]
  %v873 = vld [vmem:[%s5 + $0x484] sm:$0xff]
  %v874 = vld [vmem:[%s5 + $0x48c] sm:$0xff]
  %v875 = vld [vmem:[%s5 + $0x494] sm:$0xf]
  %v876 = vld [vmem:[%s5 + $0x498] sm:$0xff]
  %v877 = vld [vmem:[%s5 + $0x4a0] sm:$0xff]
  %v878 = vld [vmem:[%s5 + $0x4a8] sm:$0xff]
  %v879 = vld [vmem:[%s5 + $0x4b0] sm:$0xf]
  %v880 = vld [vmem:[%s5 + $0x4b4] sm:$0xff]
  %v881 = vld [vmem:[%s5 + $0x4bc] sm:$0xff]
  %v882 = vld [vmem:[%s5 + $0x4c4] sm:$0xff]
  %v883 = vld [vmem:[%s5 + $0x4cc] sm:$0xf]
  %v884 = vld [vmem:[%s5 + $0x4d0] sm:$0xff]
  %v885 = vld [vmem:[%s5 + $0x4d8] sm:$0xff]
  %v886 = vld [vmem:[%s5 + $0x4e0] sm:$0xff]
  %v887 = vld [vmem:[%s5 + $0x4e8] sm:$0xf]
  %v888 = vld [vmem:[%s5 + $0x4ec] sm:$0xff]
  %v889 = vld [vmem:[%s5 + $0x4f4] sm:$0xff]
  %v890 = vld [vmem:[%s5 + $0x4fc] sm:$0xff]
  %v891 = vld [vmem:[%s5 + $0x504] sm:$0xf]
  %v892 = vld [vmem:[%s5 + $0x508] sm:$0xff]
  %v893 = vld [vmem:[%s5 + $0x510] sm:$0xff]
  %v894 = vld [vmem:[%s5 + $0x518] sm:$0xff]
  %v895 = vld [vmem:[%s5 + $0x520] sm:$0xf]
  %v896 = vld [vmem:[%s5 + $0x524] sm:$0xff]
  %v897 = vld [vmem:[%s5 + $0x52c] sm:$0xff]
  %v898 = vld [vmem:[%s5 + $0x534] sm:$0xff]
  %v899 = vld [vmem:[%s5 + $0x53c] sm:$0xf]
  %v900 = vld [vmem:[%s5 + $0x540] sm:$0xff]
  %v901 = vld [vmem:[%s5 + $0x548] sm:$0xff]
  %v902 = vld [vmem:[%s5 + $0x550] sm:$0xff]
  %v903 = vld [vmem:[%s5 + $0x558] sm:$0xf]
  %v904 = vld [vmem:[%s5 + $0x55c] sm:$0xff]
  %v905 = vld [vmem:[%s5 + $0x564] sm:$0xff]
  %v906 = vld [vmem:[%s5 + $0x56c] sm:$0xff]
  %v907 = vld [vmem:[%s5 + $0x574] sm:$0xf]
  %v908 = vld [vmem:[%s5 + $0x578] sm:$0xff]
  %v909 = vld [vmem:[%s5 + $0x580] sm:$0xff]
  %v910 = vld [vmem:[%s5 + $0x588] sm:$0xff]
  %v911 = vld [vmem:[%s5 + $0x590] sm:$0xf]
  %v912 = vld [vmem:[%s5 + $0x594] sm:$0xff]
  %v913 = vld [vmem:[%s5 + $0x59c] sm:$0xff]
  %v914 = vld [vmem:[%s5 + $0x5a4] sm:$0xff]
  %v915 = vld [vmem:[%s5 + $0x5ac] sm:$0xf]
  %v916 = vld [vmem:[%s5 + $0x5b0] sm:$0xff]
  %v917 = vld [vmem:[%s5 + $0x5b8] sm:$0xff]
  %v918 = vld [vmem:[%s5 + $0x5c0] sm:$0xff]
  %v919 = vld [vmem:[%s5 + $0x5c8] sm:$0xf]
  %v920 = vld [vmem:[%s5 + $0x5cc] sm:$0xff]
  %v921 = vld [vmem:[%s5 + $0x5d4] sm:$0xff]
  %v922 = vld [vmem:[%s5 + $0x5dc] sm:$0xff]
  %v923 = vld [vmem:[%s5 + $0x5e4] sm:$0xf]
  %v924 = vld [vmem:[%s5 + $0x5e8] sm:$0xff]
  %v925 = vld [vmem:[%s5 + $0x5f0] sm:$0xff]
  %v926 = vld [vmem:[%s5 + $0x5f8] sm:$0xff]
  %v927 = vld [vmem:[%s5 + $0x600] sm:$0xf]
  %v928 = vld [vmem:[%s5 + $0x604] sm:$0xff]
  %v929 = vld [vmem:[%s5 + $0x60c] sm:$0xff]
  %v930 = vld [vmem:[%s5 + $0x614] sm:$0xff]
  %v931 = vld [vmem:[%s5 + $0x61c] sm:$0xf]
  %v932 = vld [vmem:[%s5 + $0x620] sm:$0xff]
  %v933 = vld [vmem:[%s5 + $0x628] sm:$0xff]
  %v934 = vld [vmem:[%s5 + $0x630] sm:$0xff]
  %v935 = vld [vmem:[%s5 + $0x638] sm:$0xf]
  %v936 = vld [vmem:[%s5 + $0x63c] sm:$0xff]
  %v937 = vld [vmem:[%s5 + $0x644] sm:$0xff]
  %v938 = vld [vmem:[%s5 + $0x64c] sm:$0xff]
  %v939 = vld [vmem:[%s5 + $0x654] sm:$0xf]
  %v940 = vld [vmem:[%s5 + $0x658] sm:$0xff]
  %v941 = vld [vmem:[%s5 + $0x660] sm:$0xff]
  %v942 = vld [vmem:[%s5 + $0x668] sm:$0xff]
  %v943 = vld [vmem:[%s5 + $0x670] sm:$0xf]
  %v944 = vld [vmem:[%s5 + $0x674] sm:$0xff]
  %v945 = vld [vmem:[%s5 + $0x67c] sm:$0xff]
  %v946 = vld [vmem:[%s5 + $0x684] sm:$0xff]
  %v947 = vld [vmem:[%s5 + $0x68c] sm:$0xf]
  %v948 = vld [vmem:[%s5 + $0x690] sm:$0xff]
  %v949 = vld [vmem:[%s5 + $0x698] sm:$0xff]
  %v950 = vld [vmem:[%s5 + $0x6a0] sm:$0xff]
  %v951 = vld [vmem:[%s5 + $0x6a8] sm:$0xf]
  %v952 = vld [vmem:[%s5 + $0x6ac] sm:$0xff]
  %v953 = vld [vmem:[%s5 + $0x6b4] sm:$0xff]
  %v954 = vld [vmem:[%s5 + $0x6bc] sm:$0xff]
  %v955 = vld [vmem:[%s5 + $0x6c4] sm:$0xf]
  %v956 = vld [vmem:[%s5 + $0x6c8] sm:$0xff]
  %v957 = vld [vmem:[%s5 + $0x6d0] sm:$0xff]
  %v958 = vld [vmem:[%s5 + $0x6d8] sm:$0xff]
  %v959 = vld [vmem:[%s5 + $0x6e0] sm:$0xf]
  %v960 = vld [vmem:[%s5 + $0x6e4] sm:$0xff]
  %v961 = vld [vmem:[%s5 + $0x6ec] sm:$0xff]
  %v962 = vld [vmem:[%s5 + $0x6f4] sm:$0xff]
  %v963 = vld [vmem:[%s5 + $0x6fc] sm:$0xf]
  %v964 = vld [vmem:[%s6] sm:$0x7f]
  %v966 = vlaneseq
  %v967 = vshrl.u32 %v966, 7
  %v968 = vsub.s32 0, %v967
  %v969 = vrot.slane %v964, %v968
  %v970 = vlaneseq
  %v971 = vshrl.u32 %v970, 7
  %v972 = vsub.s32 1, %v971
  %v973 = vrot.slane %v964, %v972
  %v974 = vlaneseq
  %v975 = vshrl.u32 %v974, 7
  %v976 = vsub.s32 2, %v975
  %v977 = vrot.slane %v964, %v976
  %v978 = vlaneseq
  %v979 = vshrl.u32 %v978, 7
  %v980 = vsub.s32 3, %v979
  %v981 = vrot.slane %v964, %v980
  %v982 = vlaneseq
  %v983 = vshrl.u32 %v982, 7
  %v984 = vsub.s32 4, %v983
  %v985 = vrot.slane %v964, %v984
  %v986 = vlaneseq
  %v987 = vshrl.u32 %v986, 7
  %v988 = vsub.s32 5, %v987
  %v989 = vrot.slane %v964, %v988
  %v990 = vlaneseq
  %v991 = vshrl.u32 %v990, 7
  %v992 = vsub.s32 6, %v991
  %v993 = vrot.slane %v964, %v992
  %v1257 = vunpack.c.l.b16 %v708
  %v1258 = vunpack.c.h.b16 %v708
  %v1259 = vunpack.c.l.b16 %v709
  %v1260 = vunpack.c.h.b16 %v709
  %v1261 = vunpack.c.l.b16 %v710
  %v1262 = vunpack.c.h.b16 %v710
  %v1263 = vunpack.c.l.b16 %v711
  %v1264 = vunpack.c.l.b16 %v712
  %v1265 = vunpack.c.h.b16 %v712
  %v1266 = vunpack.c.l.b16 %v713
  %v1267 = vunpack.c.h.b16 %v713
  %v1268 = vunpack.c.l.b16 %v714
  %v1269 = vunpack.c.h.b16 %v714
  %v1270 = vunpack.c.l.b16 %v715
  %v1271 = vunpack.c.l.b16 %v716
  %v1272 = vunpack.c.h.b16 %v716
  %v1273 = vunpack.c.l.b16 %v717
  %v1274 = vunpack.c.h.b16 %v717
  %v1275 = vunpack.c.l.b16 %v718
  %v1276 = vunpack.c.h.b16 %v718
  %v1277 = vunpack.c.l.b16 %v719
  %v1278 = vunpack.c.l.b16 %v720
  %v1279 = vunpack.c.h.b16 %v720
  %v1280 = vunpack.c.l.b16 %v721
  %v1281 = vunpack.c.h.b16 %v721
  %v1282 = vunpack.c.l.b16 %v722
  %v1283 = vunpack.c.h.b16 %v722
  %v1284 = vunpack.c.l.b16 %v723
  %v1285 = vunpack.c.l.b16 %v724
  %v1286 = vunpack.c.h.b16 %v724
  %v1287 = vunpack.c.l.b16 %v725
  %v1288 = vunpack.c.h.b16 %v725
  %v1289 = vunpack.c.l.b16 %v726
  %v1290 = vunpack.c.h.b16 %v726
  %v1291 = vunpack.c.l.b16 %v727
  %v1292 = vunpack.c.l.b16 %v728
  %v1293 = vunpack.c.h.b16 %v728
  %v1294 = vunpack.c.l.b16 %v729
  %v1295 = vunpack.c.h.b16 %v729
  %v1296 = vunpack.c.l.b16 %v730
  %v1297 = vunpack.c.h.b16 %v730
  %v1298 = vunpack.c.l.b16 %v731
  %v1299 = vunpack.c.l.b16 %v732
  %v1300 = vunpack.c.h.b16 %v732
  %v1301 = vunpack.c.l.b16 %v733
  %v1302 = vunpack.c.h.b16 %v733
  %v1303 = vunpack.c.l.b16 %v734
  %v1304 = vunpack.c.h.b16 %v734
  %v1305 = vunpack.c.l.b16 %v735
  %v1306 = vunpack.c.l.b16 %v736
  %v1307 = vunpack.c.h.b16 %v736
  %v1308 = vunpack.c.l.b16 %v737
  %v1309 = vunpack.c.h.b16 %v737
  %v1310 = vunpack.c.l.b16 %v738
  %v1311 = vunpack.c.h.b16 %v738
  %v1312 = vunpack.c.l.b16 %v739
  %v1313 = vunpack.c.l.b16 %v740
  %v1314 = vunpack.c.h.b16 %v740
  %v1315 = vunpack.c.l.b16 %v741
  %v1316 = vunpack.c.h.b16 %v741
  %v1317 = vunpack.c.l.b16 %v742
  %v1318 = vunpack.c.h.b16 %v742
  %v1319 = vunpack.c.l.b16 %v743
  %v1320 = vunpack.c.l.b16 %v744
  %v1321 = vunpack.c.h.b16 %v744
  %v1322 = vunpack.c.l.b16 %v745
  %v1323 = vunpack.c.h.b16 %v745
  %v1324 = vunpack.c.l.b16 %v746
  %v1325 = vunpack.c.h.b16 %v746
  %v1326 = vunpack.c.l.b16 %v747
  %v1327 = vunpack.c.l.b16 %v748
  %v1328 = vunpack.c.h.b16 %v748
  %v1329 = vunpack.c.l.b16 %v749
  %v1330 = vunpack.c.h.b16 %v749
  %v1331 = vunpack.c.l.b16 %v750
  %v1332 = vunpack.c.h.b16 %v750
  %v1333 = vunpack.c.l.b16 %v751
  %v1334 = vunpack.c.l.b16 %v752
  %v1335 = vunpack.c.h.b16 %v752
  %v1336 = vunpack.c.l.b16 %v753
  %v1337 = vunpack.c.h.b16 %v753
  %v1338 = vunpack.c.l.b16 %v754
  %v1339 = vunpack.c.h.b16 %v754
  %v1340 = vunpack.c.l.b16 %v755
  %v1341 = vunpack.c.l.b16 %v756
  %v1342 = vunpack.c.h.b16 %v756
  %v1343 = vunpack.c.l.b16 %v757
  %v1344 = vunpack.c.h.b16 %v757
  %v1345 = vunpack.c.l.b16 %v758
  %v1346 = vunpack.c.h.b16 %v758
  %v1347 = vunpack.c.l.b16 %v759
  %v1348 = vunpack.c.l.b16 %v760
  %v1349 = vunpack.c.h.b16 %v760
  %v1350 = vunpack.c.l.b16 %v761
  %v1351 = vunpack.c.h.b16 %v761
  %v1352 = vunpack.c.l.b16 %v762
  %v1353 = vunpack.c.h.b16 %v762
  %v1354 = vunpack.c.l.b16 %v763
  %v1355 = vunpack.c.l.b16 %v764
  %v1356 = vunpack.c.h.b16 %v764
  %v1357 = vunpack.c.l.b16 %v765
  %v1358 = vunpack.c.h.b16 %v765
  %v1359 = vunpack.c.l.b16 %v766
  %v1360 = vunpack.c.h.b16 %v766
  %v1361 = vunpack.c.l.b16 %v767
  %v1362 = vunpack.c.l.b16 %v768
  %v1363 = vunpack.c.h.b16 %v768
  %v1364 = vunpack.c.l.b16 %v769
  %v1365 = vunpack.c.h.b16 %v769
  %v1366 = vunpack.c.l.b16 %v770
  %v1367 = vunpack.c.h.b16 %v770
  %v1368 = vunpack.c.l.b16 %v771
  %v1369 = vunpack.c.l.b16 %v772
  %v1370 = vunpack.c.h.b16 %v772
  %v1371 = vunpack.c.l.b16 %v773
  %v1372 = vunpack.c.h.b16 %v773
  %v1373 = vunpack.c.l.b16 %v774
  %v1374 = vunpack.c.h.b16 %v774
  %v1375 = vunpack.c.l.b16 %v775
  %v1376 = vunpack.c.l.b16 %v776
  %v1377 = vunpack.c.h.b16 %v776
  %v1378 = vunpack.c.l.b16 %v777
  %v1379 = vunpack.c.h.b16 %v777
  %v1380 = vunpack.c.l.b16 %v778
  %v1381 = vunpack.c.h.b16 %v778
  %v1382 = vunpack.c.l.b16 %v779
  %v1383 = vunpack.c.l.b16 %v780
  %v1384 = vunpack.c.h.b16 %v780
  %v1385 = vunpack.c.l.b16 %v781
  %v1386 = vunpack.c.h.b16 %v781
  %v1387 = vunpack.c.l.b16 %v782
  %v1388 = vunpack.c.h.b16 %v782
  %v1389 = vunpack.c.l.b16 %v783
  %v1390 = vunpack.c.l.b16 %v784
  %v1391 = vunpack.c.h.b16 %v784
  %v1392 = vunpack.c.l.b16 %v785
  %v1393 = vunpack.c.h.b16 %v785
  %v1394 = vunpack.c.l.b16 %v786
  %v1395 = vunpack.c.h.b16 %v786
  %v1396 = vunpack.c.l.b16 %v787
  %v1397 = vunpack.c.l.b16 %v788
  %v1398 = vunpack.c.h.b16 %v788
  %v1399 = vunpack.c.l.b16 %v789
  %v1400 = vunpack.c.h.b16 %v789
  %v1401 = vunpack.c.l.b16 %v790
  %v1402 = vunpack.c.h.b16 %v790
  %v1403 = vunpack.c.l.b16 %v791
  %v1404 = vunpack.c.l.b16 %v792
  %v1405 = vunpack.c.h.b16 %v792
  %v1406 = vunpack.c.l.b16 %v793
  %v1407 = vunpack.c.h.b16 %v793
  %v1408 = vunpack.c.l.b16 %v794
  %v1409 = vunpack.c.h.b16 %v794
  %v1410 = vunpack.c.l.b16 %v795
  %v1411 = vunpack.c.l.b16 %v796
  %v1412 = vunpack.c.h.b16 %v796
  %v1413 = vunpack.c.l.b16 %v797
  %v1414 = vunpack.c.h.b16 %v797
  %v1415 = vunpack.c.l.b16 %v798
  %v1416 = vunpack.c.h.b16 %v798
  %v1417 = vunpack.c.l.b16 %v799
  %v1418 = vunpack.c.l.b16 %v800
  %v1419 = vunpack.c.h.b16 %v800
  %v1420 = vunpack.c.l.b16 %v801
  %v1421 = vunpack.c.h.b16 %v801
  %v1422 = vunpack.c.l.b16 %v802
  %v1423 = vunpack.c.h.b16 %v802
  %v1424 = vunpack.c.l.b16 %v803
  %v1425 = vunpack.c.l.b16 %v804
  %v1426 = vunpack.c.h.b16 %v804
  %v1427 = vunpack.c.l.b16 %v805
  %v1428 = vunpack.c.h.b16 %v805
  %v1429 = vunpack.c.l.b16 %v806
  %v1430 = vunpack.c.h.b16 %v806
  %v1431 = vunpack.c.l.b16 %v807
  %v1432 = vunpack.c.l.b16 %v808
  %v1433 = vunpack.c.h.b16 %v808
  %v1434 = vunpack.c.l.b16 %v809
  %v1435 = vunpack.c.h.b16 %v809
  %v1436 = vunpack.c.l.b16 %v810
  %v1437 = vunpack.c.h.b16 %v810
  %v1438 = vunpack.c.l.b16 %v811
  %v1439 = vunpack.c.l.b16 %v812
  %v1440 = vunpack.c.h.b16 %v812
  %v1441 = vunpack.c.l.b16 %v813
  %v1442 = vunpack.c.h.b16 %v813
  %v1443 = vunpack.c.l.b16 %v814
  %v1444 = vunpack.c.h.b16 %v814
  %v1445 = vunpack.c.l.b16 %v815
  %v1446 = vunpack.c.l.b16 %v816
  %v1447 = vunpack.c.h.b16 %v816
  %v1448 = vunpack.c.l.b16 %v817
  %v1449 = vunpack.c.h.b16 %v817
  %v1450 = vunpack.c.l.b16 %v818
  %v1451 = vunpack.c.h.b16 %v818
  %v1452 = vunpack.c.l.b16 %v819
  %v1453 = vunpack.c.l.b16 %v820
  %v1454 = vunpack.c.h.b16 %v820
  %v1455 = vunpack.c.l.b16 %v821
  %v1456 = vunpack.c.h.b16 %v821
  %v1457 = vunpack.c.l.b16 %v822
  %v1458 = vunpack.c.h.b16 %v822
  %v1459 = vunpack.c.l.b16 %v823
  %v1460 = vunpack.c.l.b16 %v824
  %v1461 = vunpack.c.h.b16 %v824
  %v1462 = vunpack.c.l.b16 %v825
  %v1463 = vunpack.c.h.b16 %v825
  %v1464 = vunpack.c.l.b16 %v826
  %v1465 = vunpack.c.h.b16 %v826
  %v1466 = vunpack.c.l.b16 %v827
  %v1467 = vunpack.c.l.b16 %v828
  %v1468 = vunpack.c.h.b16 %v828
  %v1469 = vunpack.c.l.b16 %v829
  %v1470 = vunpack.c.h.b16 %v829
  %v1471 = vunpack.c.l.b16 %v830
  %v1472 = vunpack.c.h.b16 %v830
  %v1473 = vunpack.c.l.b16 %v831
  %v1474 = vunpack.c.l.b16 %v832
  %v1475 = vunpack.c.h.b16 %v832
  %v1476 = vunpack.c.l.b16 %v833
  %v1477 = vunpack.c.h.b16 %v833
  %v1478 = vunpack.c.l.b16 %v834
  %v1479 = vunpack.c.h.b16 %v834
  %v1480 = vunpack.c.l.b16 %v835
  %v1481 = vunpack.c.l.b16 %v836
  %v1482 = vunpack.c.h.b16 %v836
  %v1483 = vunpack.c.l.b16 %v837
  %v1484 = vunpack.c.h.b16 %v837
  %v1485 = vunpack.c.l.b16 %v838
  %v1486 = vunpack.c.h.b16 %v838
  %v1487 = vunpack.c.l.b16 %v839
  %v1488 = vunpack.c.l.b16 %v840
  %v1489 = vunpack.c.h.b16 %v840
  %v1490 = vunpack.c.l.b16 %v841
  %v1491 = vunpack.c.h.b16 %v841
  %v1492 = vunpack.c.l.b16 %v842
  %v1493 = vunpack.c.h.b16 %v842
  %v1494 = vunpack.c.l.b16 %v843
  %v1495 = vunpack.c.l.b16 %v844
  %v1496 = vunpack.c.h.b16 %v844
  %v1497 = vunpack.c.l.b16 %v845
  %v1498 = vunpack.c.h.b16 %v845
  %v1499 = vunpack.c.l.b16 %v846
  %v1500 = vunpack.c.h.b16 %v846
  %v1501 = vunpack.c.l.b16 %v847
  %v1502 = vunpack.c.l.b16 %v848
  %v1503 = vunpack.c.h.b16 %v848
  %v1504 = vunpack.c.l.b16 %v849
  %v1505 = vunpack.c.h.b16 %v849
  %v1506 = vunpack.c.l.b16 %v850
  %v1507 = vunpack.c.h.b16 %v850
  %v1508 = vunpack.c.l.b16 %v851
  %v1509 = vunpack.c.l.b16 %v852
  %v1510 = vunpack.c.h.b16 %v852
  %v1511 = vunpack.c.l.b16 %v853
  %v1512 = vunpack.c.h.b16 %v853
  %v1513 = vunpack.c.l.b16 %v854
  %v1514 = vunpack.c.h.b16 %v854
  %v1515 = vunpack.c.l.b16 %v855
  %v1516 = vunpack.c.l.b16 %v856
  %v1517 = vunpack.c.h.b16 %v856
  %v1518 = vunpack.c.l.b16 %v857
  %v1519 = vunpack.c.h.b16 %v857
  %v1520 = vunpack.c.l.b16 %v858
  %v1521 = vunpack.c.h.b16 %v858
  %v1522 = vunpack.c.l.b16 %v859
  %v1523 = vunpack.c.l.b16 %v860
  %v1524 = vunpack.c.h.b16 %v860
  %v1525 = vunpack.c.l.b16 %v861
  %v1526 = vunpack.c.h.b16 %v861
  %v1527 = vunpack.c.l.b16 %v862
  %v1528 = vunpack.c.h.b16 %v862
  %v1529 = vunpack.c.l.b16 %v863
  %v1530 = vunpack.c.l.b16 %v864
  %v1531 = vunpack.c.h.b16 %v864
  %v1532 = vunpack.c.l.b16 %v865
  %v1533 = vunpack.c.h.b16 %v865
  %v1534 = vunpack.c.l.b16 %v866
  %v1535 = vunpack.c.h.b16 %v866
  %v1536 = vunpack.c.l.b16 %v867
  %v1537 = vunpack.c.l.b16 %v868
  %v1538 = vunpack.c.h.b16 %v868
  %v1539 = vunpack.c.l.b16 %v869
  %v1540 = vunpack.c.h.b16 %v869
  %v1541 = vunpack.c.l.b16 %v870
  %v1542 = vunpack.c.h.b16 %v870
  %v1543 = vunpack.c.l.b16 %v871
  %v1544 = vunpack.c.l.b16 %v872
  %v1545 = vunpack.c.h.b16 %v872
  %v1546 = vunpack.c.l.b16 %v873
  %v1547 = vunpack.c.h.b16 %v873
  %v1548 = vunpack.c.l.b16 %v874
  %v1549 = vunpack.c.h.b16 %v874
  %v1550 = vunpack.c.l.b16 %v875
  %v1551 = vunpack.c.l.b16 %v876
  %v1552 = vunpack.c.h.b16 %v876
  %v1553 = vunpack.c.l.b16 %v877
  %v1554 = vunpack.c.h.b16 %v877
  %v1555 = vunpack.c.l.b16 %v878
  %v1556 = vunpack.c.h.b16 %v878
  %v1557 = vunpack.c.l.b16 %v879
  %v1558 = vunpack.c.l.b16 %v880
  %v1559 = vunpack.c.h.b16 %v880
  %v1560 = vunpack.c.l.b16 %v881
  %v1561 = vunpack.c.h.b16 %v881
  %v1562 = vunpack.c.l.b16 %v882
  %v1563 = vunpack.c.h.b16 %v882
  %v1564 = vunpack.c.l.b16 %v883
  %v1565 = vunpack.c.l.b16 %v884
  %v1566 = vunpack.c.h.b16 %v884
  %v1567 = vunpack.c.l.b16 %v885
  %v1568 = vunpack.c.h.b16 %v885
  %v1569 = vunpack.c.l.b16 %v886
  %v1570 = vunpack.c.h.b16 %v886
  %v1571 = vunpack.c.l.b16 %v887
  %v1572 = vunpack.c.l.b16 %v888
  %v1573 = vunpack.c.h.b16 %v888
  %v1574 = vunpack.c.l.b16 %v889
  %v1575 = vunpack.c.h.b16 %v889
  %v1576 = vunpack.c.l.b16 %v890
  %v1577 = vunpack.c.h.b16 %v890
  %v1578 = vunpack.c.l.b16 %v891
  %v1579 = vunpack.c.l.b16 %v892
  %v1580 = vunpack.c.h.b16 %v892
  %v1581 = vunpack.c.l.b16 %v893
  %v1582 = vunpack.c.h.b16 %v893
  %v1583 = vunpack.c.l.b16 %v894
  %v1584 = vunpack.c.h.b16 %v894
  %v1585 = vunpack.c.l.b16 %v895
  %v1586 = vunpack.c.l.b16 %v896
  %v1587 = vunpack.c.h.b16 %v896
  %v1588 = vunpack.c.l.b16 %v897
  %v1589 = vunpack.c.h.b16 %v897
  %v1590 = vunpack.c.l.b16 %v898
  %v1591 = vunpack.c.h.b16 %v898
  %v1592 = vunpack.c.l.b16 %v899
  %v1593 = vunpack.c.l.b16 %v900
  %v1594 = vunpack.c.h.b16 %v900
  %v1595 = vunpack.c.l.b16 %v901
  %v1596 = vunpack.c.h.b16 %v901
  %v1597 = vunpack.c.l.b16 %v902
  %v1598 = vunpack.c.h.b16 %v902
  %v1599 = vunpack.c.l.b16 %v903
  %v1600 = vunpack.c.l.b16 %v904
  %v1601 = vunpack.c.h.b16 %v904
  %v1602 = vunpack.c.l.b16 %v905
  %v1603 = vunpack.c.h.b16 %v905
  %v1604 = vunpack.c.l.b16 %v906
  %v1605 = vunpack.c.h.b16 %v906
  %v1606 = vunpack.c.l.b16 %v907
  %v1607 = vunpack.c.l.b16 %v908
  %v1608 = vunpack.c.h.b16 %v908
  %v1609 = vunpack.c.l.b16 %v909
  %v1610 = vunpack.c.h.b16 %v909
  %v1611 = vunpack.c.l.b16 %v910
  %v1612 = vunpack.c.h.b16 %v910
  %v1613 = vunpack.c.l.b16 %v911
  %v1614 = vunpack.c.l.b16 %v912
  %v1615 = vunpack.c.h.b16 %v912
  %v1616 = vunpack.c.l.b16 %v913
  %v1617 = vunpack.c.h.b16 %v913
  %v1618 = vunpack.c.l.b16 %v914
  %v1619 = vunpack.c.h.b16 %v914
  %v1620 = vunpack.c.l.b16 %v915
  %v1621 = vunpack.c.l.b16 %v916
  %v1622 = vunpack.c.h.b16 %v916
  %v1623 = vunpack.c.l.b16 %v917
  %v1624 = vunpack.c.h.b16 %v917
  %v1625 = vunpack.c.l.b16 %v918
  %v1626 = vunpack.c.h.b16 %v918
  %v1627 = vunpack.c.l.b16 %v919
  %v1628 = vunpack.c.l.b16 %v920
  %v1629 = vunpack.c.h.b16 %v920
  %v1630 = vunpack.c.l.b16 %v921
  %v1631 = vunpack.c.h.b16 %v921
  %v1632 = vunpack.c.l.b16 %v922
  %v1633 = vunpack.c.h.b16 %v922
  %v1634 = vunpack.c.l.b16 %v923
  %v1635 = vunpack.c.l.b16 %v924
  %v1636 = vunpack.c.h.b16 %v924
  %v1637 = vunpack.c.l.b16 %v925
  %v1638 = vunpack.c.h.b16 %v925
  %v1639 = vunpack.c.l.b16 %v926
  %v1640 = vunpack.c.h.b16 %v926
  %v1641 = vunpack.c.l.b16 %v927
  %v1642 = vunpack.c.l.b16 %v928
  %v1643 = vunpack.c.h.b16 %v928
  %v1644 = vunpack.c.l.b16 %v929
  %v1645 = vunpack.c.h.b16 %v929
  %v1646 = vunpack.c.l.b16 %v930
  %v1647 = vunpack.c.h.b16 %v930
  %v1648 = vunpack.c.l.b16 %v931
  %v1649 = vunpack.c.l.b16 %v932
  %v1650 = vunpack.c.h.b16 %v932
  %v1651 = vunpack.c.l.b16 %v933
  %v1652 = vunpack.c.h.b16 %v933
  %v1653 = vunpack.c.l.b16 %v934
  %v1654 = vunpack.c.h.b16 %v934
  %v1655 = vunpack.c.l.b16 %v935
  %v1656 = vunpack.c.l.b16 %v936
  %v1657 = vunpack.c.h.b16 %v936
  %v1658 = vunpack.c.l.b16 %v937
  %v1659 = vunpack.c.h.b16 %v937
  %v1660 = vunpack.c.l.b16 %v938
  %v1661 = vunpack.c.h.b16 %v938
  %v1662 = vunpack.c.l.b16 %v939
  %v1663 = vunpack.c.l.b16 %v940
  %v1664 = vunpack.c.h.b16 %v940
  %v1665 = vunpack.c.l.b16 %v941
  %v1666 = vunpack.c.h.b16 %v941
  %v1667 = vunpack.c.l.b16 %v942
  %v1668 = vunpack.c.h.b16 %v942
  %v1669 = vunpack.c.l.b16 %v943
  %v1670 = vunpack.c.l.b16 %v944
  %v1671 = vunpack.c.h.b16 %v944
  %v1672 = vunpack.c.l.b16 %v945
  %v1673 = vunpack.c.h.b16 %v945
  %v1674 = vunpack.c.l.b16 %v946
  %v1675 = vunpack.c.h.b16 %v946
  %v1676 = vunpack.c.l.b16 %v947
  %v1677 = vunpack.c.l.b16 %v948
  %v1678 = vunpack.c.h.b16 %v948
  %v1679 = vunpack.c.l.b16 %v949
  %v1680 = vunpack.c.h.b16 %v949
  %v1681 = vunpack.c.l.b16 %v950
  %v1682 = vunpack.c.h.b16 %v950
  %v1683 = vunpack.c.l.b16 %v951
  %v1684 = vunpack.c.l.b16 %v952
  %v1685 = vunpack.c.h.b16 %v952
  %v1686 = vunpack.c.l.b16 %v953
  %v1687 = vunpack.c.h.b16 %v953
  %v1688 = vunpack.c.l.b16 %v954
  %v1689 = vunpack.c.h.b16 %v954
  %v1690 = vunpack.c.l.b16 %v955
  %v1691 = vunpack.c.l.b16 %v956
  %v1692 = vunpack.c.h.b16 %v956
  %v1693 = vunpack.c.l.b16 %v957
  %v1694 = vunpack.c.h.b16 %v957
  %v1695 = vunpack.c.l.b16 %v958
  %v1696 = vunpack.c.h.b16 %v958
  %v1697 = vunpack.c.l.b16 %v959
  %v1698 = vunpack.c.l.b16 %v960
  %v1699 = vunpack.c.h.b16 %v960
  %v1700 = vunpack.c.l.b16 %v961
  %v1701 = vunpack.c.h.b16 %v961
  %v1702 = vunpack.c.l.b16 %v962
  %v1703 = vunpack.c.h.b16 %v962
  %v1704 = vunpack.c.l.b16 %v963
  %v1705 = vpack.c.b16 %v1264, %v1257
  %v1706 = vpack.c.b16 %v1265, %v1258
  %v1707 = vpack.c.b16 %v1266, %v1259
  %v1708 = vpack.c.b16 %v1267, %v1260
  %v1709 = vpack.c.b16 %v1268, %v1261
  %v1710 = vpack.c.b16 %v1269, %v1262
  %v1711 = vpack.c.b16 %v1270, %v1263
  %v1712 = vpack.c.b16 %v1278, %v1271
  %v1713 = vpack.c.b16 %v1279, %v1272
  %v1714 = vpack.c.b16 %v1280, %v1273
  %v1715 = vpack.c.b16 %v1281, %v1274
  %v1716 = vpack.c.b16 %v1282, %v1275
  %v1717 = vpack.c.b16 %v1283, %v1276
  %v1718 = vpack.c.b16 %v1284, %v1277
  %v1719 = vpack.c.b16 %v1292, %v1285
  %v1720 = vpack.c.b16 %v1293, %v1286
  %v1721 = vpack.c.b16 %v1294, %v1287
  %v1722 = vpack.c.b16 %v1295, %v1288
  %v1723 = vpack.c.b16 %v1296, %v1289
  %v1724 = vpack.c.b16 %v1297, %v1290
  %v1725 = vpack.c.b16 %v1298, %v1291
  %v1726 = vpack.c.b16 %v1306, %v1299
  %v1727 = vpack.c.b16 %v1307, %v1300
  %v1728 = vpack.c.b16 %v1308, %v1301
  %v1729 = vpack.c.b16 %v1309, %v1302
  %v1730 = vpack.c.b16 %v1310, %v1303
  %v1731 = vpack.c.b16 %v1311, %v1304
  %v1732 = vpack.c.b16 %v1312, %v1305
  %v1733 = vpack.c.b16 %v1320, %v1313
  %v1734 = vpack.c.b16 %v1321, %v1314
  %v1735 = vpack.c.b16 %v1322, %v1315
  %v1736 = vpack.c.b16 %v1323, %v1316
  %v1737 = vpack.c.b16 %v1324, %v1317
  %v1738 = vpack.c.b16 %v1325, %v1318
  %v1739 = vpack.c.b16 %v1326, %v1319
  %v1740 = vpack.c.b16 %v1334, %v1327
  %v1741 = vpack.c.b16 %v1335, %v1328
  %v1742 = vpack.c.b16 %v1336, %v1329
  %v1743 = vpack.c.b16 %v1337, %v1330
  %v1744 = vpack.c.b16 %v1338, %v1331
  %v1745 = vpack.c.b16 %v1339, %v1332
  %v1746 = vpack.c.b16 %v1340, %v1333
  %v1747 = vpack.c.b16 %v1348, %v1341
  %v1748 = vpack.c.b16 %v1349, %v1342
  %v1749 = vpack.c.b16 %v1350, %v1343
  %v1750 = vpack.c.b16 %v1351, %v1344
  %v1751 = vpack.c.b16 %v1352, %v1345
  %v1752 = vpack.c.b16 %v1353, %v1346
  %v1753 = vpack.c.b16 %v1354, %v1347
  %v1754 = vpack.c.b16 %v1362, %v1355
  %v1755 = vpack.c.b16 %v1363, %v1356
  %v1756 = vpack.c.b16 %v1364, %v1357
  %v1757 = vpack.c.b16 %v1365, %v1358
  %v1758 = vpack.c.b16 %v1366, %v1359
  %v1759 = vpack.c.b16 %v1367, %v1360
  %v1760 = vpack.c.b16 %v1368, %v1361
  %v1761 = vpack.c.b16 %v1376, %v1369
  %v1762 = vpack.c.b16 %v1377, %v1370
  %v1763 = vpack.c.b16 %v1378, %v1371
  %v1764 = vpack.c.b16 %v1379, %v1372
  %v1765 = vpack.c.b16 %v1380, %v1373
  %v1766 = vpack.c.b16 %v1381, %v1374
  %v1767 = vpack.c.b16 %v1382, %v1375
  %v1768 = vpack.c.b16 %v1390, %v1383
  %v1769 = vpack.c.b16 %v1391, %v1384
  %v1770 = vpack.c.b16 %v1392, %v1385
  %v1771 = vpack.c.b16 %v1393, %v1386
  %v1772 = vpack.c.b16 %v1394, %v1387
  %v1773 = vpack.c.b16 %v1395, %v1388
  %v1774 = vpack.c.b16 %v1396, %v1389
  %v1775 = vpack.c.b16 %v1404, %v1397
  %v1776 = vpack.c.b16 %v1405, %v1398
  %v1777 = vpack.c.b16 %v1406, %v1399
  %v1778 = vpack.c.b16 %v1407, %v1400
  %v1779 = vpack.c.b16 %v1408, %v1401
  %v1780 = vpack.c.b16 %v1409, %v1402
  %v1781 = vpack.c.b16 %v1410, %v1403
  %v1782 = vpack.c.b16 %v1418, %v1411
  %v1783 = vpack.c.b16 %v1419, %v1412
  %v1784 = vpack.c.b16 %v1420, %v1413
  %v1785 = vpack.c.b16 %v1421, %v1414
  %v1786 = vpack.c.b16 %v1422, %v1415
  %v1787 = vpack.c.b16 %v1423, %v1416
  %v1788 = vpack.c.b16 %v1424, %v1417
  %v1789 = vpack.c.b16 %v1432, %v1425
  %v1790 = vpack.c.b16 %v1433, %v1426
  %v1791 = vpack.c.b16 %v1434, %v1427
  %v1792 = vpack.c.b16 %v1435, %v1428
  %v1793 = vpack.c.b16 %v1436, %v1429
  %v1794 = vpack.c.b16 %v1437, %v1430
  %v1795 = vpack.c.b16 %v1438, %v1431
  %v1796 = vpack.c.b16 %v1446, %v1439
  %v1797 = vpack.c.b16 %v1447, %v1440
  %v1798 = vpack.c.b16 %v1448, %v1441
  %v1799 = vpack.c.b16 %v1449, %v1442
  %v1800 = vpack.c.b16 %v1450, %v1443
  %v1801 = vpack.c.b16 %v1451, %v1444
  %v1802 = vpack.c.b16 %v1452, %v1445
  %v1803 = vpack.c.b16 %v1460, %v1453
  %v1804 = vpack.c.b16 %v1461, %v1454
  %v1805 = vpack.c.b16 %v1462, %v1455
  %v1806 = vpack.c.b16 %v1463, %v1456
  %v1807 = vpack.c.b16 %v1464, %v1457
  %v1808 = vpack.c.b16 %v1465, %v1458
  %v1809 = vpack.c.b16 %v1466, %v1459
  %v1810 = vpack.c.b16 %v1474, %v1467
  %v1811 = vpack.c.b16 %v1475, %v1468
  %v1812 = vpack.c.b16 %v1476, %v1469
  %v1813 = vpack.c.b16 %v1477, %v1470
  %v1814 = vpack.c.b16 %v1478, %v1471
  %v1815 = vpack.c.b16 %v1479, %v1472
  %v1816 = vpack.c.b16 %v1480, %v1473
  %v1817 = vpack.c.b16 %v1488, %v1481
  %v1818 = vpack.c.b16 %v1489, %v1482
  %v1819 = vpack.c.b16 %v1490, %v1483
  %v1820 = vpack.c.b16 %v1491, %v1484
  %v1821 = vpack.c.b16 %v1492, %v1485
  %v1822 = vpack.c.b16 %v1493, %v1486
  %v1823 = vpack.c.b16 %v1494, %v1487
  %v1824 = vpack.c.b16 %v1502, %v1495
  %v1825 = vpack.c.b16 %v1503, %v1496
  %v1826 = vpack.c.b16 %v1504, %v1497
  %v1827 = vpack.c.b16 %v1505, %v1498
  %v1828 = vpack.c.b16 %v1506, %v1499
  %v1829 = vpack.c.b16 %v1507, %v1500
  %v1830 = vpack.c.b16 %v1508, %v1501
  %v1831 = vpack.c.b16 %v1516, %v1509
  %v1832 = vpack.c.b16 %v1517, %v1510
  %v1833 = vpack.c.b16 %v1518, %v1511
  %v1834 = vpack.c.b16 %v1519, %v1512
  %v1835 = vpack.c.b16 %v1520, %v1513
  %v1836 = vpack.c.b16 %v1521, %v1514
  %v1837 = vpack.c.b16 %v1522, %v1515
  %v1838 = vpack.c.b16 %v1530, %v1523
  %v1839 = vpack.c.b16 %v1531, %v1524
  %v1840 = vpack.c.b16 %v1532, %v1525
  %v1841 = vpack.c.b16 %v1533, %v1526
  %v1842 = vpack.c.b16 %v1534, %v1527
  %v1843 = vpack.c.b16 %v1535, %v1528
  %v1844 = vpack.c.b16 %v1536, %v1529
  %v1845 = vpack.c.b16 %v1544, %v1537
  %v1846 = vpack.c.b16 %v1545, %v1538
  %v1847 = vpack.c.b16 %v1546, %v1539
  %v1848 = vpack.c.b16 %v1547, %v1540
  %v1849 = vpack.c.b16 %v1548, %v1541
  %v1850 = vpack.c.b16 %v1549, %v1542
  %v1851 = vpack.c.b16 %v1550, %v1543
  %v1852 = vpack.c.b16 %v1558, %v1551
  %v1853 = vpack.c.b16 %v1559, %v1552
  %v1854 = vpack.c.b16 %v1560, %v1553
  %v1855 = vpack.c.b16 %v1561, %v1554
  %v1856 = vpack.c.b16 %v1562, %v1555
  %v1857 = vpack.c.b16 %v1563, %v1556
  %v1858 = vpack.c.b16 %v1564, %v1557
  %v1859 = vpack.c.b16 %v1572, %v1565
  %v1860 = vpack.c.b16 %v1573, %v1566
  %v1861 = vpack.c.b16 %v1574, %v1567
  %v1862 = vpack.c.b16 %v1575, %v1568
  %v1863 = vpack.c.b16 %v1576, %v1569
  %v1864 = vpack.c.b16 %v1577, %v1570
  %v1865 = vpack.c.b16 %v1578, %v1571
  %v1866 = vpack.c.b16 %v1586, %v1579
  %v1867 = vpack.c.b16 %v1587, %v1580
  %v1868 = vpack.c.b16 %v1588, %v1581
  %v1869 = vpack.c.b16 %v1589, %v1582
  %v1870 = vpack.c.b16 %v1590, %v1583
  %v1871 = vpack.c.b16 %v1591, %v1584
  %v1872 = vpack.c.b16 %v1592, %v1585
  %v1873 = vpack.c.b16 %v1600, %v1593
  %v1874 = vpack.c.b16 %v1601, %v1594
  %v1875 = vpack.c.b16 %v1602, %v1595
  %v1876 = vpack.c.b16 %v1603, %v1596
  %v1877 = vpack.c.b16 %v1604, %v1597
  %v1878 = vpack.c.b16 %v1605, %v1598
  %v1879 = vpack.c.b16 %v1606, %v1599
  %v1880 = vpack.c.b16 %v1614, %v1607
  %v1881 = vpack.c.b16 %v1615, %v1608
  %v1882 = vpack.c.b16 %v1616, %v1609
  %v1883 = vpack.c.b16 %v1617, %v1610
  %v1884 = vpack.c.b16 %v1618, %v1611
  %v1885 = vpack.c.b16 %v1619, %v1612
  %v1886 = vpack.c.b16 %v1620, %v1613
  %v1887 = vpack.c.b16 %v1628, %v1621
  %v1888 = vpack.c.b16 %v1629, %v1622
  %v1889 = vpack.c.b16 %v1630, %v1623
  %v1890 = vpack.c.b16 %v1631, %v1624
  %v1891 = vpack.c.b16 %v1632, %v1625
  %v1892 = vpack.c.b16 %v1633, %v1626
  %v1893 = vpack.c.b16 %v1634, %v1627
  %v1894 = vpack.c.b16 %v1642, %v1635
  %v1895 = vpack.c.b16 %v1643, %v1636
  %v1896 = vpack.c.b16 %v1644, %v1637
  %v1897 = vpack.c.b16 %v1645, %v1638
  %v1898 = vpack.c.b16 %v1646, %v1639
  %v1899 = vpack.c.b16 %v1647, %v1640
  %v1900 = vpack.c.b16 %v1648, %v1641
  %v1901 = vpack.c.b16 %v1656, %v1649
  %v1902 = vpack.c.b16 %v1657, %v1650
  %v1903 = vpack.c.b16 %v1658, %v1651
  %v1904 = vpack.c.b16 %v1659, %v1652
  %v1905 = vpack.c.b16 %v1660, %v1653
  %v1906 = vpack.c.b16 %v1661, %v1654
  %v1907 = vpack.c.b16 %v1662, %v1655
  %v1908 = vpack.c.b16 %v1670, %v1663
  %v1909 = vpack.c.b16 %v1671, %v1664
  %v1910 = vpack.c.b16 %v1672, %v1665
  %v1911 = vpack.c.b16 %v1673, %v1666
  %v1912 = vpack.c.b16 %v1674, %v1667
  %v1913 = vpack.c.b16 %v1675, %v1668
  %v1914 = vpack.c.b16 %v1676, %v1669
  %v1915 = vpack.c.b16 %v1684, %v1677
  %v1916 = vpack.c.b16 %v1685, %v1678
  %v1917 = vpack.c.b16 %v1686, %v1679
  %v1918 = vpack.c.b16 %v1687, %v1680
  %v1919 = vpack.c.b16 %v1688, %v1681
  %v1920 = vpack.c.b16 %v1689, %v1682
  %v1921 = vpack.c.b16 %v1690, %v1683
  %v1922 = vpack.c.b16 %v1698, %v1691
  %v1923 = vpack.c.b16 %v1699, %v1692
  %v1924 = vpack.c.b16 %v1700, %v1693
  %v1925 = vpack.c.b16 %v1701, %v1694
  %v1926 = vpack.c.b16 %v1702, %v1695
  %v1927 = vpack.c.b16 %v1703, %v1696
  %v1928 = vpack.c.b16 %v1704, %v1697
  %2153 = vmatprep.subr.bf16.mxu0 %v1706
  %2154 = vmatpush1.bf16.msra.mxu0 %v1705
  %2155 = vmatprep.subr.bf16.mxu0 %v1713
  %2156 = vmatpush1.bf16.msra.mxu0 %v1712
  %2157 = vmatprep.subr.bf16.mxu0 %v1720
  %2158 = vmatpush1.bf16.msra.mxu0 %v1719
  %2159 = vmatprep.subr.bf16.mxu0 %v1727
  %2160 = vmatpush1.bf16.msra.mxu0 %v1726
  %2161 = vmatprep.subr.bf16.mxu0 %v1734
  %2162 = vmatpush1.bf16.msra.mxu0 %v1733
  %2163 = vmatprep.subr.bf16.mxu0 %v1741
  %2164 = vmatpush1.bf16.msra.mxu0 %v1740
  %2165 = vmatprep.subr.bf16.mxu0 %v1748
  %2166 = vmatpush1.bf16.msra.mxu0 %v1747
  %2167 = vmatprep.subr.bf16.mxu0 %v1755
  %2168 = vmatpush1.bf16.msra.mxu0 %v1754
  %2169 = vmatprep.subr.bf16.mxu0 %v1762
  %2170 = vmatpush1.bf16.msra.mxu0 %v1761
  %2171 = vmatprep.subr.bf16.mxu0 %v1769
  %2172 = vmatpush1.bf16.msra.mxu0 %v1768
  %2173 = vmatprep.subr.bf16.mxu0 %v1776
  %2174 = vmatpush1.bf16.msra.mxu0 %v1775
  %2175 = vmatprep.subr.bf16.mxu0 %v1783
  %2176 = vmatpush1.bf16.msra.mxu0 %v1782
  %2177 = vmatprep.subr.bf16.mxu0 %v1790
  %2178 = vmatpush1.bf16.msra.mxu0 %v1789
  %2179 = vmatprep.subr.bf16.mxu0 %v1797
  %2180 = vmatpush1.bf16.msra.mxu0 %v1796
  %2181 = vmatprep.subr.bf16.mxu0 %v1804
  %2182 = vmatpush1.bf16.msra.mxu0 %v1803
  %2183 = vmatprep.subr.bf16.mxu0 %v1811
  %2184 = vmatpush1.bf16.msra.mxu0 %v1810
  %2185 = vmatprep.mubr.bf16.mxu0 %v705
  %2186 = vmatmul.mubr.bf16.gmra.mrb[0].mxu0 %v704
  %v2187 = vpop.f32.mrb[0].mxu0
  %v2188 = vadd.f32 %v969, %v2187
  %v2189 = vpop.f32.mrb[0].mxu0
  %v2190 = vadd.f32 %v973, %v2189
  %v2191 = vpop.f32.mrb[0].mxu0
  %v2192 = vadd.f32 %v969, %v2191
  %v2193 = vpop.f32.mrb[0].mxu0
  %v2194 = vadd.f32 %v973, %v2193
  %2195 = vdwg.mxu0
  %2196 = vmatprep.subr.bf16.mxu0 %v1818
  %2197 = vmatpush1.bf16.msra.mxu0 %v1817
  %2198 = vmatprep.subr.bf16.mxu0 %v1825
  %2199 = vmatpush1.bf16.msra.mxu0 %v1824
  %2200 = vmatprep.subr.bf16.mxu0 %v1832
  %2201 = vmatpush1.bf16.msra.mxu0 %v1831
  %2202 = vmatprep.subr.bf16.mxu0 %v1839
  %2203 = vmatpush1.bf16.msra.mxu0 %v1838
  %2204 = vmatprep.subr.bf16.mxu0 %v1846
  %2205 = vmatpush1.bf16.msra.mxu0 %v1845
  %2206 = vmatprep.subr.bf16.mxu0 %v1853
  %2207 = vmatpush1.bf16.msra.mxu0 %v1852
  %2208 = vmatprep.subr.bf16.mxu0 %v1860
  %2209 = vmatpush1.bf16.msra.mxu0 %v1859
  %2210 = vmatprep.subr.bf16.mxu0 %v1867
  %2211 = vmatpush1.bf16.msra.mxu0 %v1866
  %2212 = vmatprep.subr.bf16.mxu0 %v1874
  %2213 = vmatpush1.bf16.msra.mxu0 %v1873
  %2214 = vmatprep.subr.bf16.mxu0 %v1881
  %2215 = vmatpush1.bf16.msra.mxu0 %v1880
  %2216 = vmatprep.subr.bf16.mxu0 %v1888
  %2217 = vmatpush1.bf16.msra.mxu0 %v1887
  %2218 = vmatprep.subr.bf16.mxu0 %v1895
  %2219 = vmatpush1.bf16.msra.mxu0 %v1894
  %2220 = vmatprep.subr.bf16.mxu0 %v1902
  %2221 = vmatpush1.bf16.msra.mxu0 %v1901
  %2222 = vmatprep.subr.bf16.mxu0 %v1909
  %2223 = vmatpush1.bf16.msra.mxu0 %v1908
  %2224 = vmatprep.subr.bf16.mxu0 %v1916
  %2225 = vmatpush1.bf16.msra.mxu0 %v1915
  %2226 = vmatprep.subr.bf16.mxu0 %v1923
  %2227 = vmatpush1.bf16.msra.mxu0 %v1922
  %2228 = vmatprep.mubr.bf16.mxu0 %v707
  %2229 = vmatmul.mubr.bf16.gmra.mrb[0].mxu0 %v706
  %v2230 = vpop.f32.mrb[0].mxu0
  %v2231 = vadd.f32 %v2188, %v2230
  %v2232 = vpop.f32.mrb[0].mxu0
  %v2233 = vadd.f32 %v2190, %v2232
  %v2234 = vpop.f32.mrb[0].mxu0
  %v2235 = vadd.f32 %v2192, %v2234
  %v2236 = vpop.f32.mrb[0].mxu0
  %v2237 = vadd.f32 %v2194, %v2236
  %2238 = vdwg.mxu0
  %2239 = vmatprep.subr.bf16.mxu0 %v1708
  %2240 = vmatpush1.bf16.msra.mxu0 %v1707
  %2241 = vmatprep.subr.bf16.mxu0 %v1715
  %2242 = vmatpush1.bf16.msra.mxu0 %v1714
  %2243 = vmatprep.subr.bf16.mxu0 %v1722
  %2244 = vmatpush1.bf16.msra.mxu0 %v1721
  %2245 = vmatprep.subr.bf16.mxu0 %v1729
  %2246 = vmatpush1.bf16.msra.mxu0 %v1728
  %2247 = vmatprep.subr.bf16.mxu0 %v1736
  %2248 = vmatpush1.bf16.msra.mxu0 %v1735
  %2249 = vmatprep.subr.bf16.mxu0 %v1743
  %2250 = vmatpush1.bf16.msra.mxu0 %v1742
  %2251 = vmatprep.subr.bf16.mxu0 %v1750
  %2252 = vmatpush1.bf16.msra.mxu0 %v1749
  %2253 = vmatprep.subr.bf16.mxu0 %v1757
  %2254 = vmatpush1.bf16.msra.mxu0 %v1756
  %2255 = vmatprep.subr.bf16.mxu0 %v1764
  %2256 = vmatpush1.bf16.msra.mxu0 %v1763
  %2257 = vmatprep.subr.bf16.mxu0 %v1771
  %2258 = vmatpush1.bf16.msra.mxu0 %v1770
  %2259 = vmatprep.subr.bf16.mxu0 %v1778
  %2260 = vmatpush1.bf16.msra.mxu0 %v1777
  %2261 = vmatprep.subr.bf16.mxu0 %v1785
  %2262 = vmatpush1.bf16.msra.mxu0 %v1784
  %2263 = vmatprep.subr.bf16.mxu0 %v1792
  %2264 = vmatpush1.bf16.msra.mxu0 %v1791
  %2265 = vmatprep.subr.bf16.mxu0 %v1799
  %2266 = vmatpush1.bf16.msra.mxu0 %v1798
  %2267 = vmatprep.subr.bf16.mxu0 %v1806
  %2268 = vmatpush1.bf16.msra.mxu0 %v1805
  %2269 = vmatprep.subr.bf16.mxu0 %v1813
  %2270 = vmatpush1.bf16.msra.mxu0 %v1812
  %2271 = vmatprep.mubr.bf16.mxu0 %v705
  %2272 = vmatmul.mubr.bf16.gmra.mrb[0].mxu0 %v704
  %v2273 = vpop.f32.mrb[0].mxu0
  %v2274 = vadd.f32 %v977, %v2273
  %v2275 = vpop.f32.mrb[0].mxu0
  %v2276 = vadd.f32 %v981, %v2275
  %v2277 = vpop.f32.mrb[0].mxu0
  %v2278 = vadd.f32 %v977, %v2277
  %v2279 = vpop.f32.mrb[0].mxu0
  %v2280 = vadd.f32 %v981, %v2279
  %2281 = vdwg.mxu0
  %2282 = vmatprep.subr.bf16.mxu0 %v1820
  %2283 = vmatpush1.bf16.msra.mxu0 %v1819
  %2284 = vmatprep.subr.bf16.mxu0 %v1827
  %2285 = vmatpush1.bf16.msra.mxu0 %v1826
  %2286 = vmatprep.subr.bf16.mxu0 %v1834
  %2287 = vmatpush1.bf16.msra.mxu0 %v1833
  %2288 = vmatprep.subr.bf16.mxu0 %v1841
  %2289 = vmatpush1.bf16.msra.mxu0 %v1840
  %2290 = vmatprep.subr.bf16.mxu0 %v1848
  %2291 = vmatpush1.bf16.msra.mxu0 %v1847
  %2292 = vmatprep.subr.bf16.mxu0 %v1855
  %2293 = vmatpush1.bf16.msra.mxu0 %v1854
  %2294 = vmatprep.subr.bf16.mxu0 %v1862
  %2295 = vmatpush1.bf16.msra.mxu0 %v1861
  %2296 = vmatprep.subr.bf16.mxu0 %v1869
  %2297 = vmatpush1.bf16.msra.mxu0 %v1868
  %2298 = vmatprep.subr.bf16.mxu0 %v1876
  %2299 = vmatpush1.bf16.msra.mxu0 %v1875
  %2300 = vmatprep.subr.bf16.mxu0 %v1883
  %2301 = vmatpush1.bf16.msra.mxu0 %v1882
  %2302 = vmatprep.subr.bf16.mxu0 %v1890
  %2303 = vmatpush1.bf16.msra.mxu0 %v1889
  %2304 = vmatprep.subr.bf16.mxu0 %v1897
  %2305 = vmatpush1.bf16.msra.mxu0 %v1896
  %2306 = vmatprep.subr.bf16.mxu0 %v1904
  %2307 = vmatpush1.bf16.msra.mxu0 %v1903
  %2308 = vmatprep.subr.bf16.mxu0 %v1911
  %2309 = vmatpush1.bf16.msra.mxu0 %v1910
  %2310 = vmatprep.subr.bf16.mxu0 %v1918
  %2311 = vmatpush1.bf16.msra.mxu0 %v1917
  %2312 = vmatprep.subr.bf16.mxu0 %v1925
  %2313 = vmatpush1.bf16.msra.mxu0 %v1924
  %2314 = vmatprep.mubr.bf16.mxu0 %v707
  %2315 = vmatmul.mubr.bf16.gmra.mrb[0].mxu0 %v706
  %v2316 = vpop.f32.mrb[0].mxu0
  %v2317 = vadd.f32 %v2274, %v2316
  %v2318 = vpop.f32.mrb[0].mxu0
  %v2319 = vadd.f32 %v2276, %v2318
  %v2320 = vpop.f32.mrb[0].mxu0
  %v2321 = vadd.f32 %v2278, %v2320
  %v2322 = vpop.f32.mrb[0].mxu0
  %v2323 = vadd.f32 %v2280, %v2322
  %2324 = vdwg.mxu0
  %2325 = vmatprep.subr.bf16.mxu0 %v1710
  %2326 = vmatpush1.bf16.msra.mxu0 %v1709
  %2327 = vmatprep.subr.bf16.mxu0 %v1717
  %2328 = vmatpush1.bf16.msra.mxu0 %v1716
  %2329 = vmatprep.subr.bf16.mxu0 %v1724
  %2330 = vmatpush1.bf16.msra.mxu0 %v1723
  %2331 = vmatprep.subr.bf16.mxu0 %v1731
  %2332 = vmatpush1.bf16.msra.mxu0 %v1730
  %2333 = vmatprep.subr.bf16.mxu0 %v1738
  %2334 = vmatpush1.bf16.msra.mxu0 %v1737
  %2335 = vmatprep.subr.bf16.mxu0 %v1745
  %2336 = vmatpush1.bf16.msra.mxu0 %v1744
  %2337 = vmatprep.subr.bf16.mxu0 %v1752
  %2338 = vmatpush1.bf16.msra.mxu0 %v1751
  %2339 = vmatprep.subr.bf16.mxu0 %v1759
  %2340 = vmatpush1.bf16.msra.mxu0 %v1758
  %2341 = vmatprep.subr.bf16.mxu0 %v1766
  %2342 = vmatpush1.bf16.msra.mxu0 %v1765
  %2343 = vmatprep.subr.bf16.mxu0 %v1773
  %2344 = vmatpush1.bf16.msra.mxu0 %v1772
  %2345 = vmatprep.subr.bf16.mxu0 %v1780
  %2346 = vmatpush1.bf16.msra.mxu0 %v1779
  %2347 = vmatprep.subr.bf16.mxu0 %v1787
  %2348 = vmatpush1.bf16.msra.mxu0 %v1786
  %2349 = vmatprep.subr.bf16.mxu0 %v1794
  %2350 = vmatpush1.bf16.msra.mxu0 %v1793
  %2351 = vmatprep.subr.bf16.mxu0 %v1801
  %2352 = vmatpush1.bf16.msra.mxu0 %v1800
  %2353 = vmatprep.subr.bf16.mxu0 %v1808
  %2354 = vmatpush1.bf16.msra.mxu0 %v1807
  %2355 = vmatprep.subr.bf16.mxu0 %v1815
  %2356 = vmatpush1.bf16.msra.mxu0 %v1814
  %2357 = vmatprep.mubr.bf16.mxu0 %v705
  %2358 = vmatmul.mubr.bf16.gmra.mrb[0].mxu0 %v704
  %v2359 = vpop.f32.mrb[0].mxu0
  %v2360 = vadd.f32 %v985, %v2359
  %v2361 = vpop.f32.mrb[0].mxu0
  %v2362 = vadd.f32 %v989, %v2361
  %v2363 = vpop.f32.mrb[0].mxu0
  %v2364 = vadd.f32 %v985, %v2363
  %v2365 = vpop.f32.mrb[0].mxu0
  %v2366 = vadd.f32 %v989, %v2365
  %2367 = vdwg.mxu0
  %2368 = vmatprep.subr.bf16.mxu0 %v1822
  %2369 = vmatpush1.bf16.msra.mxu0 %v1821
  %2370 = vmatprep.subr.bf16.mxu0 %v1829
  %2371 = vmatpush1.bf16.msra.mxu0 %v1828
  %2372 = vmatprep.subr.bf16.mxu0 %v1836
  %2373 = vmatpush1.bf16.msra.mxu0 %v1835
  %2374 = vmatprep.subr.bf16.mxu0 %v1843
  %2375 = vmatpush1.bf16.msra.mxu0 %v1842
  %2376 = vmatprep.subr.bf16.mxu0 %v1850
  %2377 = vmatpush1.bf16.msra.mxu0 %v1849
  %2378 = vmatprep.subr.bf16.mxu0 %v1857
  %2379 = vmatpush1.bf16.msra.mxu0 %v1856
  %2380 = vmatprep.subr.bf16.mxu0 %v1864
  %2381 = vmatpush1.bf16.msra.mxu0 %v1863
  %2382 = vmatprep.subr.bf16.mxu0 %v1871
  %2383 = vmatpush1.bf16.msra.mxu0 %v1870
  %2384 = vmatprep.subr.bf16.mxu0 %v1878
  %2385 = vmatpush1.bf16.msra.mxu0 %v1877
  %2386 = vmatprep.subr.bf16.mxu0 %v1885
  %2387 = vmatpush1.bf16.msra.mxu0 %v1884
  %2388 = vmatprep.subr.bf16.mxu0 %v1892
  %2389 = vmatpush1.bf16.msra.mxu0 %v1891
  %2390 = vmatprep.subr.bf16.mxu0 %v1899
  %2391 = vmatpush1.bf16.msra.mxu0 %v1898
  %2392 = vmatprep.subr.bf16.mxu0 %v1906
  %2393 = vmatpush1.bf16.msra.mxu0 %v1905
  %2394 = vmatprep.subr.bf16.mxu0 %v1913
  %2395 = vmatpush1.bf16.msra.mxu0 %v1912
  %2396 = vmatprep.subr.bf16.mxu0 %v1920
  %2397 = vmatpush1.bf16.msra.mxu0 %v1919
  %2398 = vmatprep.subr.bf16.mxu0 %v1927
  %2399 = vmatpush1.bf16.msra.mxu0 %v1926
  %2400 = vmatprep.mubr.bf16.mxu0 %v707
  %2401 = vmatmul.mubr.bf16.gmra.mrb[0].mxu0 %v706
  %v2402 = vpop.f32.mrb[0].mxu0
  %v2403 = vadd.f32 %v2360, %v2402
  %v2404 = vpop.f32.mrb[0].mxu0
  %v2405 = vadd.f32 %v2362, %v2404
  %v2406 = vpop.f32.mrb[0].mxu0
  %v2407 = vadd.f32 %v2364, %v2406
  %v2408 = vpop.f32.mrb[0].mxu0
  %v2409 = vadd.f32 %v2366, %v2408
  %2410 = vdwg.mxu0
  %2411 = vmatprep.subr.bf16.mxu0 0
  %2412 = vmatpush1.bf16.msra.mxu0 %v1711
  %2413 = vmatprep.subr.bf16.mxu0 0
  %2414 = vmatpush1.bf16.msra.mxu0 %v1718
  %2415 = vmatprep.subr.bf16.mxu0 0
  %2416 = vmatpush1.bf16.msra.mxu0 %v1725
  %2417 = vmatprep.subr.bf16.mxu0 0
  %2418 = vmatpush1.bf16.msra.mxu0 %v1732
  %2419 = vmatprep.subr.bf16.mxu0 0
  %2420 = vmatpush1.bf16.msra.mxu0 %v1739
  %2421 = vmatprep.subr.bf16.mxu0 0
  %2422 = vmatpush1.bf16.msra.mxu0 %v1746
  %2423 = vmatprep.subr.bf16.mxu0 0
  %2424 = vmatpush1.bf16.msra.mxu0 %v1753
  %2425 = vmatprep.subr.bf16.mxu0 0
  %2426 = vmatpush1.bf16.msra.mxu0 %v1760
  %2427 = vmatprep.subr.bf16.mxu0 0
  %2428 = vmatpush1.bf16.msra.mxu0 %v1767
  %2429 = vmatprep.subr.bf16.mxu0 0
  %2430 = vmatpush1.bf16.msra.mxu0 %v1774
  %2431 = vmatprep.subr.bf16.mxu0 0
  %2432 = vmatpush1.bf16.msra.mxu0 %v1781
  %2433 = vmatprep.subr.bf16.mxu0 0
  %2434 = vmatpush1.bf16.msra.mxu0 %v1788
  %2435 = vmatprep.subr.bf16.mxu0 0
  %2436 = vmatpush1.bf16.msra.mxu0 %v1795
  %2437 = vmatprep.subr.bf16.mxu0 0
  %2438 = vmatpush1.bf16.msra.mxu0 %v1802
  %2439 = vmatprep.subr.bf16.mxu0 0
  %2440 = vmatpush1.bf16.msra.mxu0 %v1809
  %2441 = vmatprep.subr.bf16.mxu0 0
  %2442 = vmatpush1.bf16.msra.mxu0 %v1816
  %2443 = vmatprep.mubr.bf16.mxu0 %v705
  %2444 = vmatmul.mubr.bf16.gmra.mrb[0].mxu0 %v704
  %v2445 = vpop.f32.mrb[0].mxu0
  %v2446 = vadd.f32 %v993, %v2445
  %v2447 = vpop.f32.mrb[0].mxu0
  %v2448 = vpop.f32.mrb[0].mxu0
  %v2449 = vadd.f32 %v993, %v2448
  %v2450 = vpop.f32.mrb[0].mxu0
  %2451 = vdwg.mxu0
  %2452 = vmatprep.subr.bf16.mxu0 0
  %2453 = vmatpush1.bf16.msra.mxu0 %v1823
  %2454 = vmatprep.subr.bf16.mxu0 0
  %2455 = vmatpush1.bf16.msra.mxu0 %v1830
  %2456 = vmatprep.subr.bf16.mxu0 0
  %2457 = vmatpush1.bf16.msra.mxu0 %v1837
  %2458 = vmatprep.subr.bf16.mxu0 0
  %2459 = vmatpush1.bf16.msra.mxu0 %v1844
  %2460 = vmatprep.subr.bf16.mxu0 0
  %2461 = vmatpush1.bf16.msra.mxu0 %v1851
  %2462 = vmatprep.subr.bf16.mxu0 0
  %2463 = vmatpush1.bf16.msra.mxu0 %v1858
  %2464 = vmatprep.subr.bf16.mxu0 0
  %2465 = vmatpush1.bf16.msra.mxu0 %v1865
  %2466 = vmatprep.subr.bf16.mxu0 0
  %2467 = vmatpush1.bf16.msra.mxu0 %v1872
  %2468 = vmatprep.subr.bf16.mxu0 0
  %2469 = vmatpush1.bf16.msra.mxu0 %v1879
  %2470 = vmatprep.subr.bf16.mxu0 0
  %2471 = vmatpush1.bf16.msra.mxu0 %v1886
  %2472 = vmatprep.subr.bf16.mxu0 0
  %2473 = vmatpush1.bf16.msra.mxu0 %v1893
  %2474 = vmatprep.subr.bf16.mxu0 0
  %2475 = vmatpush1.bf16.msra.mxu0 %v1900
  %2476 = vmatprep.subr.bf16.mxu0 0
  %2477 = vmatpush1.bf16.msra.mxu0 %v1907
  %2478 = vmatprep.subr.bf16.mxu0 0
  %2479 = vmatpush1.bf16.msra.mxu0 %v1914
  %2480 = vmatprep.subr.bf16.mxu0 0
  %2481 = vmatpush1.bf16.msra.mxu0 %v1921
  %2482 = vmatprep.subr.bf16.mxu0 0
  %2483 = vmatpush1.bf16.msra.mxu0 %v1928
  %2484 = vmatprep.mubr.bf16.mxu0 %v707
  %2485 = vmatmul.mubr.bf16.gmra.mrb[0].mxu0 %v706
  %v2486 = vpop.f32.mrb[0].mxu0
  %v2487 = vadd.f32 %v2446, %v2486
  %v2488 = vpop.f32.mrb[0].mxu0
  %v2489 = vpop.f32.mrb[0].mxu0
  %v2490 = vadd.f32 %v2449, %v2489
  %v2491 = vpop.f32.mrb[0].mxu0
  %2492 = vdwg.mxu0
  %v2493 = vmax.f32 %v2231, 0.0
  %v2494 = vmax.f32 %v2233, 0.0
  %v2495 = vmax.f32 %v2317, 0.0
  %v2496 = vmax.f32 %v2319, 0.0
  %v2497 = vmax.f32 %v2403, 0.0
  %v2498 = vmax.f32 %v2405, 0.0
  %v2499 = vmax.f32 %v2487, 0.0
  %v2500 = vmax.f32 %v2235, 0.0
  %v2501 = vmax.f32 %v2237, 0.0
  %v2502 = vmax.f32 %v2321, 0.0
  %v2503 = vmax.f32 %v2323, 0.0
  %v2504 = vmax.f32 %v2407, 0.0
  %v2505 = vmax.f32 %v2409, 0.0
  %v2506 = vmax.f32 %v2490, 0.0
  %v2507 = vxor.u32 %v2493, 2147483648
  %v2508 = vxor.u32 %v2494, 2147483648
  %v2509 = vxor.u32 %v2495, 2147483648
  %v2510 = vxor.u32 %v2496, 2147483648
  %v2511 = vxor.u32 %v2497, 2147483648
  %v2512 = vxor.u32 %v2498, 2147483648
  %v2513 = vxor.u32 %v2499, 2147483648
  %v2514 = vxor.u32 %v2500, 2147483648
  %v2515 = vxor.u32 %v2501, 2147483648
  %v2516 = vxor.u32 %v2502, 2147483648
  %v2517 = vxor.u32 %v2503, 2147483648
  %v2518 = vxor.u32 %v2504, 2147483648
  %v2519 = vxor.u32 %v2505, 2147483648
  %v2520 = vxor.u32 %v2506, 2147483648
  %v2521 = vmul.f32 %v2507, 1.442695
  %v2522 = vpow.pop %v2521
  %v2523 = vmul.f32 %v2508, 1.442695
  %v2524 = vpow.pop %v2523
  %v2525 = vmul.f32 %v2509, 1.442695
  %v2526 = vpow.pop %v2525
  %v2527 = vmul.f32 %v2510, 1.442695
  %v2528 = vpow.pop %v2527
  %v2529 = vmul.f32 %v2511, 1.442695
  %v2530 = vpow.pop %v2529
  %v2531 = vmul.f32 %v2512, 1.442695
  %v2532 = vpow.pop %v2531
  %v2533 = vmul.f32 %v2513, 1.442695
  %v2534 = vpow.pop %v2533
  %v2535 = vmul.f32 %v2514, 1.442695
  %v2536 = vpow.pop %v2535
  %v2537 = vmul.f32 %v2515, 1.442695
  %v2538 = vpow.pop %v2537
  %v2539 = vmul.f32 %v2516, 1.442695
  %v2540 = vpow.pop %v2539
  %v2541 = vmul.f32 %v2517, 1.442695
  %v2542 = vpow.pop %v2541
  %v2543 = vmul.f32 %v2518, 1.442695
  %v2544 = vpow.pop %v2543
  %v2545 = vmul.f32 %v2519, 1.442695
  %v2546 = vpow.pop %v2545
  %v2547 = vmul.f32 %v2520, 1.442695
  %v2548 = vpow.pop %v2547
  %v2549 = vadd.f32 %v2522, 1.0
  %v2550 = vadd.f32 %v2524, 1.0
  %v2551 = vadd.f32 %v2526, 1.0
  %v2552 = vadd.f32 %v2528, 1.0
  %v2553 = vadd.f32 %v2530, 1.0
  %v2554 = vadd.f32 %v2532, 1.0
  %v2555 = vadd.f32 %v2534, 1.0
  %v2556 = vadd.f32 %v2536, 1.0
  %v2557 = vadd.f32 %v2538, 1.0
  %v2558 = vadd.f32 %v2540, 1.0
  %v2559 = vadd.f32 %v2542, 1.0
  %v2560 = vadd.f32 %v2544, 1.0
  %v2561 = vadd.f32 %v2546, 1.0
  %v2562 = vadd.f32 %v2548, 1.0
  %v2563 = vrcp.pop %v2549
  %v2564 = vmul.f32 1.0, %v2563
  %v2565 = vrcp.pop %v2550
  %v2566 = vmul.f32 1.0, %v2565
  %v2567 = vrcp.pop %v2551
  %v2568 = vmul.f32 1.0, %v2567
  %v2569 = vrcp.pop %v2552
  %v2570 = vmul.f32 1.0, %v2569
  %v2571 = vrcp.pop %v2553
  %v2572 = vmul.f32 1.0, %v2571
  %v2573 = vrcp.pop %v2554
  %v2574 = vmul.f32 1.0, %v2573
  %v2575 = vrcp.pop %v2555
  %v2576 = vmul.f32 1.0, %v2575
  %v2577 = vrcp.pop %v2556
  %v2578 = vmul.f32 1.0, %v2577
  %v2579 = vrcp.pop %v2557
  %v2580 = vmul.f32 1.0, %v2579
  %v2581 = vrcp.pop %v2558
  %v2582 = vmul.f32 1.0, %v2581
  %v2583 = vrcp.pop %v2559
  %v2584 = vmul.f32 1.0, %v2583
  %v2585 = vrcp.pop %v2560
  %v2586 = vmul.f32 1.0, %v2585
  %v2587 = vrcp.pop %v2561
  %v2588 = vmul.f32 1.0, %v2587
  %v2589 = vrcp.pop %v2562
  %v2590 = vmul.f32 1.0, %v2589
  %v2591 = vpack.c.bf16 %v2578, %v2564
  %v2592 = vpack.c.bf16 %v2580, %v2566
  %v2593 = vpack.c.bf16 %v2582, %v2568
  %v2594 = vpack.c.bf16 %v2584, %v2570
  %v2595 = vpack.c.bf16 %v2586, %v2572
  %v2596 = vpack.c.bf16 %v2588, %v2574
  %v2597 = vpack.c.bf16 %v2590, %v2576
  %v2605 = vunpack.c.l.b16 %v2591
  %v2606 = vunpack.c.l.b16 %v2592
  %v2607 = vunpack.c.l.b16 %v2593
  %v2608 = vunpack.c.l.b16 %v2594
  %v2609 = vunpack.c.l.b16 %v2595
  %v2610 = vunpack.c.l.b16 %v2596
  %v2611 = vunpack.c.l.b16 %v2597
  %v2612 = vunpack.c.h.b16 %v2591
  %v2613 = vunpack.c.h.b16 %v2592
  %v2614 = vunpack.c.h.b16 %v2593
  %v2615 = vunpack.c.h.b16 %v2594
  %v2616 = vunpack.c.h.b16 %v2595
  %v2617 = vunpack.c.h.b16 %v2596
  %v2618 = vunpack.c.h.b16 %v2597
  %v2619 = vpack.c.b16 %v2606, %v2605
  %v2620 = vpack.c.b16 %v2608, %v2607
  %v2621 = vpack.c.b16 %v2610, %v2609
  %v2622 = vpack.c.b16 %v2611, %v2611
  %v2623 = vpack.c.b16 %v2613, %v2612
  %v2624 = vpack.c.b16 %v2615, %v2614
  %v2625 = vpack.c.b16 %v2617, %v2616
  %v2626 = vpack.c.b16 %v2618, %v2618
  %2635 = vst [vmem:[%s7] sm:$0xff] %v2619
  %2636 = vst [vmem:[%s7 + $0x8] sm:$0xff] %v2620
  %2637 = vst [vmem:[%s7 + $0x10] sm:$0xff] %v2621
  %vm2638 = vcmask 125952
  %2639 = vst.msk [vmem:[%s7 + $0x18] sm:$0xf] %vm2638, %v2622
  %2640 = vst [vmem:[%s7 + $0x1c] sm:$0xff] %v2623
  %2641 = vst [vmem:[%s7 + $0x24] sm:$0xff] %v2624
  %2642 = vst [vmem:[%s7 + $0x2c] sm:$0xff] %v2625
  %2643 = vst.msk [vmem:[%s7 + $0x34] sm:$0xf] %vm2638, %v2626
  // Predicated region
  $region30: #{decoder_mlp.1} parent=0 // pred_check
    _
  $region31: #{decoder_mlp.1} parent=0 // pred_check_branch
    %2645 = sbr.rel (0) target = $region33
  $region32: #{decoder_mlp.1} parent=0 // pred_region
    _
  $region33: #{decoder_mlp.1} parent=0 // pred_fallthru
    _
  // Predicated region
  $region34: #{decoder_mlp.1} parent=0 // pred_check
    _
  $region35: #{decoder_mlp.1} parent=0 // pred_check_branch
    %2647 = sbr.rel (0) target = $region37
  $region36: #{decoder_mlp.1} parent=0 // pred_region
    _
  $region37: #{decoder_mlp.1} parent=0 // pred_fallthru
    _

</llo_original>
